<compile_context>
chip_gen: v7x
topology: tpu7x:2x2x1
jax: 0.10.0
libtpu: 0.0.40
codegen_flags: <defaults>
</compile_context>

<pallas_src>
import math
from functools import partial

import jax
import jax.numpy as jnp
from jax.experimental import pallas as pl
from jax.experimental.pallas import tpu as pltpu


_VOCAB_PAD = 128    # token rows [0, _VOCAB_PAD), position rows start at _VOCAB_PAD
_TABLE_ROWS = 256   # padded combined embedding-table rows (lane-friendly)


# ------------------------------ shared math ----------------------------------

def _layernorm(x, g, b, eps=1e-12):
    # one-pass mean/variance: halves the cross-lane XLU reductions
    m = jnp.mean(x, axis=-1, keepdims=True)
    m2 = jnp.mean(x * x, axis=-1, keepdims=True)
    var = m2 - m * m
    return (x - m) * jax.lax.rsqrt(var + eps) * g + b


# ------------------------------ Pallas kernel ---------------------------------

def _mtl_kernel(B, S, H, F,
                ids_ref, mask_ref, emb_ref,
                wqkv_ref, wo_ref, w1_ref, w2_ref, wh_ref, vecs_ref,
                logits_ref):
    """Embeddings + 1 BERT encoder layer + [CLS] pool + fused MTL heads.

    ids_ref:    (B*S, 1) int32 flattened token ids
    mask_ref:   (B*S, B*S) f32 combined additive mask (padding + block-diag)
    emb_ref:    (256, H)  combined [token | position] embedding table
    wqkv_ref:   (H, 3H)   fused Q|K|V projection
    wh_ref:     (H, 128)  fused [type|polarity|town] heads, lane-padded
    vecs_ref:   (9, 128)  packed small parameter vectors (lane offset 0 slices)
    logits_ref: (B, 128)  lane-dense padded logits (sliced in the wrapper)
    """
    BS = B * S
    scale = 1.0 / math.sqrt(H)

    # --- packed small parameter vectors (static, lane-offset-0 slices) ---
    vecs = vecs_ref[...]
    bqkv = vecs[0:1, :3 * H]
    bo = vecs[1:2, :H]
    ln1g = vecs[2:3, :H]
    ln1b = vecs[3:4, :H]
    b1 = vecs[4:5, :F]
    b2 = vecs[5:6, :H]
    ln2g = vecs[6:7, :H]
    ln2b = vecs[7:8, :H]
    bh = vecs[8:9, :]

    # --- fused token + position embedding lookup: one-hot MXU matmul ---
    V = emb_ref.shape[0]
    ids = ids_ref[...]                                               # (BS, 1)
    row = jax.lax.broadcasted_iota(jnp.int32, (BS, 1), 0)
    pos_id = (row % S) + _VOCAB_PAD                                  # (BS, 1)
    lane = jax.lax.broadcasted_iota(jnp.int32, (BS, V), 1)
    onehot = jnp.logical_or(lane == ids, lane == pos_id).astype(jnp.float32)
    x = jnp.dot(onehot, emb_ref[...], preferred_element_type=jnp.float32)  # (BS, H)

    # --- fused QKV projection: one MXU pass, M = B*S, N = 3H ---
    qkv = jnp.dot(x, wqkv_ref[...], preferred_element_type=jnp.float32) + bqkv
    q = qkv[:, 0:H]
    k = qkv[:, H:2 * H]
    v = qkv[:, 2 * H:3 * H]

    # --- block-diagonal single-head self-attention over all rows at once ---
    scores = jax.lax.dot_general(
        q, k, (((1,), (1,)), ((), ())),
        preferred_element_type=jnp.float32) * scale                  # (BS, BS)
    scores = scores + mask_ref[...]            # padding + cross-sequence mask
    s_max = jnp.max(scores, axis=-1, keepdims=True)
    p = jnp.exp(scores - s_max)
    p = p / jnp.sum(p, axis=-1, keepdims=True)
    ctx = jnp.dot(p, v, preferred_element_type=jnp.float32)          # (BS, H)

    # --- attention output projection + residual + LayerNorm ---
    attn = jnp.dot(ctx, wo_ref[...], preferred_element_type=jnp.float32) + bo
    h = _layernorm(x + attn, ln1g, ln1b)                             # (BS, H)

    # --- feed-forward + residual + LayerNorm ---
    ff = jnp.dot(h, w1_ref[...], preferred_element_type=jnp.float32) + b1
    ff = jax.nn.gelu(ff, approximate=True)  # tanh GELU (HF default is erf; ~1e-3 diff)
    ff = jnp.dot(ff, w2_ref[...], preferred_element_type=jnp.float32) + b2
    out = _layernorm(h + ff, ln2g, ln2b)                             # (BS, H)

    # --- [CLS] pooling via one-hot selection matmul (no scratch / no partial stores) ---
    rsel = jax.lax.broadcasted_iota(jnp.int32, (B, BS), 1)
    csel = jax.lax.broadcasted_iota(jnp.int32, (B, BS), 0) * S
    sel = (rsel == csel).astype(jnp.float32)                         # (B, BS)
    pooled = jnp.dot(sel, out, preferred_element_type=jnp.float32)   # (B, H)
    # Dropout(p=0.05) is identity in eval mode.

    # --- fused multi-task heads: one (B,H)@(H,128) matmul, lane-dense store ---
    logits_ref[...] = (
        jnp.dot(pooled, wh_ref[...], preferred_element_type=jnp.float32) + bh)


# ------------------------------ kernel wrapper --------------------------------

def run_mtl_kernel(ids_flat, mask_full, packed, B, S):
    """ids_flat: (B*S,1) int32, mask_full: (B*S,B*S) f32 -> (B,128) padded logits."""
    H = packed["emb"].shape[1]
    F = packed["w1"].shape[1]
    npad = packed["w_heads"].shape[1]
    kernel = partial(_mtl_kernel, B, S, H, F)
    vmem = pl.BlockSpec(memory_space=pltpu.MemorySpace.VMEM)

    return pl.pallas_call(
        kernel,
        out_shape=jax.ShapeDtypeStruct((B, npad), jnp.float32),
        in_specs=[vmem] * 9,
        out_specs=vmem,
    )(
        ids_flat, mask_full, packed["emb"],
        packed["wqkv"], packed["wo"], packed["w1"], packed["w2"],
        packed["w_heads"], packed["vecs"],
    )


# --------------------------- parameter construction ---------------------------

def init_params(key, vocab=100, max_seq=8, hidden=32, ffn=64,
                n_type=2, n_polarity=2, n_town=2):
    ks = jax.random.split(key, 16)
    s = 0.02
    return {
        "tok_emb": jax.random.normal(ks[0], (vocab, hidden), jnp.float32) * s,
        "pos_emb": jax.random.normal(ks[1], (max_seq, hidden), jnp.float32) * s,
        "wq": jax.random.normal(ks[2], (hidden, hidden), jnp.float32) * s,
        "bq": jnp.zeros((1, hidden), jnp.float32),
        "wk": jax.random.normal(ks[3], (hidden, hidden), jnp.float32) * s,
        "bk": jnp.zeros((1, hidden), jnp.float32),
        "wv": jax.random.normal(ks[4], (hidden, hidden), jnp.float32) * s,
        "bv": jnp.zeros((1, hidden), jnp.float32),
        "wo": jax.random.normal(ks[5], (hidden, hidden), jnp.float32) * s,
        "bo": jnp.zeros((1, hidden), jnp.float32),
        "ln1_g": jnp.ones((1, hidden), jnp.float32),
        "ln1_b": jnp.zeros((1, hidden), jnp.float32),
        "w1": jax.random.normal(ks[6], (hidden, ffn), jnp.float32) * s,
        "b1": jnp.zeros((1, ffn), jnp.float32),
        "w2": jax.random.normal(ks[7], (ffn, hidden), jnp.float32) * s,
        "b2": jnp.zeros((1, hidden), jnp.float32),
        "ln2_g": jnp.ones((1, hidden), jnp.float32),
        "ln2_b": jnp.zeros((1, hidden), jnp.float32),
        # classifier heads (nn.Linear(hidden, n) stored as (hidden, n))
        "w_type": jax.random.normal(ks[8], (hidden, n_type), jnp.float32) * s,
        "b_type": jnp.zeros((n_type,), jnp.float32),
        "w_polarity": jax.random.normal(ks[9], (hidden, n_polarity), jnp.float32) * s,
        "b_polarity": jnp.zeros((n_polarity,), jnp.float32),
        "w_town": jax.random.normal(ks[10], (hidden, n_town), jnp.float32) * s,
        "b_town": jnp.zeros((n_town,), jnp.float32),
    }


def prepare_params(p, n_pad=128):
    """One-time packing (hoisted off the hot path):
       - combined [token | position] embedding table (token rows 0..127,
         position rows at offset _VOCAB_PAD), padded to 256 rows
       - fuse Q|K|V into a single (H, 3H) projection
       - fuse & lane-pad the three head weights to (H, 128)
       - pack all small (1, X) vectors into one (9, 128) operand."""
    H = p["wq"].shape[0]
    F = p["w1"].shape[1]
    S = p["pos_emb"].shape[0]
    vocab = p["tok_emb"].shape[0]
    assert vocab <= _VOCAB_PAD and _VOCAB_PAD + S <= _TABLE_ROWS

    packed = {}
    emb = jnp.zeros((_TABLE_ROWS, H), jnp.float32)
    emb = emb.at[:vocab, :].set(p["tok_emb"])
    emb = emb.at[_VOCAB_PAD:_VOCAB_PAD + S, :].set(p["pos_emb"])
    packed["emb"] = emb

    packed["wqkv"] = jnp.concatenate([p["wq"], p["wk"], p["wv"]], axis=1)  # (H, 3H)
    packed["wo"] = p["wo"]
    packed["w1"] = p["w1"]
    packed["w2"] = p["w2"]

    w_cat = jnp.concatenate([p["w_type"], p["w_polarity"], p["w_town"]], axis=1)
    b_cat = jnp.concatenate([p["b_type"], p["b_polarity"], p["b_town"]])
    n_tot = w_cat.shape[1]
    n_pad = max(n_pad, n_tot)
    packed["w_heads"] = jnp.zeros((H, n_pad), jnp.float32).at[:, :n_tot].set(w_cat)

    vw = max(128, 3 * H, F, n_pad)   # lane width of the packed-vector operand

    def row(v):
        v = jnp.asarray(v).reshape(-1)
        return jnp.zeros((vw,), jnp.float32).at[:v.shape[0]].set(v)

    bqkv = jnp.concatenate([p["bq"], p["bk"], p["bv"]], axis=1)
    b_heads = jnp.zeros((n_pad,), jnp.float32).at[:n_tot].set(b_cat)
    packed["vecs"] = jnp.stack([
        row(bqkv), row(p["bo"]), row(p["ln1_g"]), row(p["ln1_b"]),
        row(p["b1"]), row(p["b2"]), row(p["ln2_g"]), row(p["ln2_b"]),
        row(b_heads),
    ], axis=0)                                                        # (9, vw)
    return packed


# --------------------------------- forward ------------------------------------

def mtl_classifier_forward(packed, input_ids, attention_mask,
                           n_type=2, n_polarity=2, n_town=2):
    """Pallas-backed forward pass of MTLClassifier (eval mode)."""
    B, S = input_ids.shape
    BS = B * S

    ids_flat = input_ids.reshape(BS, 1).astype(jnp.int32)

    # combined additive mask: -1e9 on padded keys and on cross-sequence entries
    mask_f = attention_mask.astype(jnp.float32).reshape(BS)
    seq = jnp.arange(BS, dtype=jnp.int32) // S
    block = jnp.where(seq[:, None] == seq[None, :], 0.0, -1e9).astype(jnp.float32)
    mask_full = block + (1.0 - mask_f)[None, :] * (-1e9)              # (BS, BS)

    logits_pad = run_mtl_kernel(ids_flat, mask_full, packed, B, S)    # (B, 128)

    n_tot = n_type + n_polarity + n_town
    logits = logits_pad[:, :n_tot]
    return {
        "logits_type": logits[:, :n_type],
        "logits_polarity": logits[:, n_type:n_type + n_polarity],
        "logits_town": logits[:, n_type + n_polarity:n_tot],
    }


# --------------------------- pure-JAX reference --------------------------------

def _reference_logits(p, input_ids, attention_mask):
    hp = jax.lax.Precision.HIGHEST
    dot = lambda a, b: jnp.dot(a, b, precision=hp)
    B, S = input_ids.shape
    H = p["tok_emb"].shape[1]

    x = jnp.take(p["tok_emb"], input_ids, axis=0) + p["pos_emb"][None, :S, :]
    x2 = x.reshape(B * S, H)
    wqkv = jnp.concatenate([p["wq"], p["wk"], p["wv"]], axis=1)
    bqkv = jnp.concatenate([p["bq"], p["bk"], p["bv"]], axis=1)
    qkv = dot(x2, wqkv) + bqkv
    q, k, v = qkv[:, :H], qkv[:, H:2 * H], qkv[:, 2 * H:]
    add = (1.0 - attention_mask.astype(jnp.float32)) * (-1e9)
    parts = []
    for b in range(B):
        sl = slice(b * S, (b + 1) * S)
        s = dot(q[sl], k[sl].T) / math.sqrt(H) + add[b][None, :]
        parts.append(dot(jax.nn.softmax(s, axis=-1), v[sl]))
    attn = dot(jnp.concatenate(parts, axis=0), p["wo"]) + p["bo"]
    h = _layernorm(x2 + attn, p["ln1_g"], p["ln1_b"])
    ff = jax.nn.gelu(dot(h, p["w1"]) + p["b1"], approximate=True)
    ff = dot(ff, p["w2"]) + p["b2"]
    out = _layernorm(h + ff, p["ln2_g"], p["ln2_b"])
    pooled = out.reshape(B, S, H)[:, 0, :]
    w_cat = jnp.concatenate([p["w_type"], p["w_polarity"], p["w_town"]], axis=1)
    b_cat = jnp.concatenate([p["b_type"], p["b_polarity"], p["b_town"]])
    return dot(pooled, w_cat) + b_cat[None, :]


# ----------------------------------- main --------------------------------------

if __name__ == "__main__":
    key = jax.random.PRNGKey(0)
    k_param, k_ids = jax.random.split(key, 2)

    B, S, H = 2, 8, 32
    params = init_params(k_param, vocab=100, max_seq=S, hidden=H, ffn=64)
    packed = prepare_params(params)

    input_ids = jax.random.randint(k_ids, (B, S), 0, 100, dtype=jnp.int32)
    # second example has 2 padding tokens at the end
    attention_mask = jnp.array([[1] * S, [1] * (S - 2) + [0] * 2], dtype=jnp.int32)

    fwd = jax.jit(lambda ids, am: mtl_classifier_forward(packed, ids, am))
    out = fwd(input_ids, attention_mask)
    jax.block_until_ready(out)

    assert out["logits_type"].shape == (B, 2)
    assert out["logits_polarity"].shape == (B, 2)
    assert out["logits_town"].shape == (B, 2)

    got = jnp.concatenate(
        [out["logits_type"], out["logits_polarity"], out["logits_town"]], axis=1)
    ref = _reference_logits(params, input_ids, attention_mask)
    assert bool(jnp.all(jnp.isfinite(got)))
    assert bool(jnp.allclose(got, ref, atol=1e-2, rtol=1e-2)), \
        float(jnp.max(jnp.abs(got - ref)))

    print("KERNEL_OK")
</pallas_src>

<mosaic_0001>
module attributes {stable_mosaic.version = 11 : i64} {
  func.func @_mtl_kernel(%arg0: memref<16x1xi32, #tpu.memory_space<vmem>>, %arg1: memref<16x16xf32, #tpu.memory_space<vmem>>, %arg2: memref<256x32xf32, #tpu.memory_space<vmem>>, %arg3: memref<32x96xf32, #tpu.memory_space<vmem>>, %arg4: memref<32x32xf32, #tpu.memory_space<vmem>>, %arg5: memref<32x64xf32, #tpu.memory_space<vmem>>, %arg6: memref<64x32xf32, #tpu.memory_space<vmem>>, %arg7: memref<32x128xf32, #tpu.memory_space<vmem>>, %arg8: memref<9x128xf32, #tpu.memory_space<vmem>>, %arg9: memref<2x128xf32, #tpu.memory_space<vmem>>) attributes {dimension_semantics = [], scalar_prefetch = 0 : i64, scratch_operands = 0 : i64, tpu.core_type = #tpu.core_type<tc>} {
    %c0 = arith.constant 0 : index
    %c0_0 = arith.constant 0 : index
    %0 = vector.load %arg8[%c0, %c0_0] : memref<9x128xf32, #tpu.memory_space<vmem>>, vector<9x128xf32>
    %1 = vector.extract_strided_slice %0 {offsets = [0, 0], sizes = [1, 96], strides = [1, 1]} : vector<9x128xf32> to vector<1x96xf32>
    %2 = vector.extract_strided_slice %0 {offsets = [1, 0], sizes = [1, 32], strides = [1, 1]} : vector<9x128xf32> to vector<1x32xf32>
    %3 = vector.extract_strided_slice %0 {offsets = [2, 0], sizes = [1, 32], strides = [1, 1]} : vector<9x128xf32> to vector<1x32xf32>
    %4 = vector.extract_strided_slice %0 {offsets = [3, 0], sizes = [1, 32], strides = [1, 1]} : vector<9x128xf32> to vector<1x32xf32>
    %5 = vector.extract_strided_slice %0 {offsets = [4, 0], sizes = [1, 64], strides = [1, 1]} : vector<9x128xf32> to vector<1x64xf32>
    %6 = vector.extract_strided_slice %0 {offsets = [5, 0], sizes = [1, 32], strides = [1, 1]} : vector<9x128xf32> to vector<1x32xf32>
    %7 = vector.extract_strided_slice %0 {offsets = [6, 0], sizes = [1, 32], strides = [1, 1]} : vector<9x128xf32> to vector<1x32xf32>
    %8 = vector.extract_strided_slice %0 {offsets = [7, 0], sizes = [1, 32], strides = [1, 1]} : vector<9x128xf32> to vector<1x32xf32>
    %9 = vector.extract_strided_slice %0 {offsets = [8, 0], sizes = [1, 128], strides = [1, 1]} : vector<9x128xf32> to vector<1x128xf32>
    %c0_1 = arith.constant 0 : index
    %c0_2 = arith.constant 0 : index
    %10 = vector.load %arg0[%c0_1, %c0_2] : memref<16x1xi32, #tpu.memory_space<vmem>>, vector<16x1xi32>
    %11 = tpu.iota {dimensions = array<i32: 0>} : vector<16x1xi32>
    %c8_i32 = arith.constant 8 : i32
    %c0_i32 = arith.constant 0 : i32
    %12 = arith.cmpi eq, %c8_i32, %c0_i32 : i32
    %c1_i32 = arith.constant 1 : i32
    %13 = arith.select %12, %c1_i32, %c8_i32 : i32
    %14 = vector.broadcast %13 : i32 to vector<16x1xi32>
    %15 = arith.remsi %11, %14 : vector<16x1xi32>
    %c0_i32_3 = arith.constant 0 : i32
    %16 = vector.broadcast %c0_i32_3 : i32 to vector<16x1xi32>
    %17 = arith.cmpi ne, %15, %16 : vector<16x1xi32>
    %c0_i32_4 = arith.constant 0 : i32
    %18 = vector.broadcast %c0_i32_4 : i32 to vector<16x1xi32>
    %19 = arith.cmpi slt, %15, %18 : vector<16x1xi32>
    %c0_i32_5 = arith.constant 0 : i32
    %20 = arith.cmpi slt, %13, %c0_i32_5 : i32
    %21 = vector.broadcast %20 : i1 to vector<16x1xi1>
    %22 = vector.broadcast %21 : vector<16x1xi1> to vector<16x1xi1>
    %23 = arith.xori %19, %22 : vector<16x1xi1>
    %24 = arith.andi %23, %17 : vector<16x1xi1>
    %25 = vector.broadcast %13 : i32 to vector<16x1xi32>
    %26 = arith.addi %15, %25 : vector<16x1xi32>
    %27 = arith.select %24, %26, %15 : vector<16x1xi1>, vector<16x1xi32>
    %c128_i32 = arith.constant 128 : i32
    %28 = vector.broadcast %c128_i32 : i32 to vector<16x1xi32>
    %29 = arith.addi %27, %28 : vector<16x1xi32>
    %30 = tpu.iota {dimensions = array<i32: 1>} : vector<16x256xi32>
    %31 = vector.broadcast %10 : vector<16x1xi32> to vector<16x256xi32>
    %32 = arith.cmpi eq, %30, %31 : vector<16x256xi32>
    %33 = vector.broadcast %29 : vector<16x1xi32> to vector<16x256xi32>
    %34 = arith.cmpi eq, %30, %33 : vector<16x256xi32>
    %35 = arith.ori %32, %34 : vector<16x256xi1>
    %36 = arith.extui %35 : vector<16x256xi1> to vector<16x256xi32>
    %37 = arith.sitofp %36 : vector<16x256xi32> to vector<16x256xf32>
    %c0_6 = arith.constant 0 : index
    %c0_7 = arith.constant 0 : index
    %38 = vector.load %arg2[%c0_6, %c0_7] : memref<256x32xf32, #tpu.memory_space<vmem>>, vector<256x32xf32>
    %cst = arith.constant dense<0.000000e+00> : vector<16x32xf32>
    %39 = tpu.matmul %37, %38, %cst {dimension_numbers = #tpu.dot_dimension_numbers<[1], [0], [0], [1], [0, 0, 1, 1], [], []>} : vector<16x256xf32>, vector<256x32xf32>, vector<16x32xf32> -> vector<16x32xf32>
    %c0_8 = arith.constant 0 : index
    %c0_9 = arith.constant 0 : index
    %40 = vector.load %arg3[%c0_8, %c0_9] : memref<32x96xf32, #tpu.memory_space<vmem>>, vector<32x96xf32>
    %cst_10 = arith.constant dense<0.000000e+00> : vector<16x96xf32>
    %41 = tpu.matmul %39, %40, %cst_10 {dimension_numbers = #tpu.dot_dimension_numbers<[1], [0], [0], [1], [0, 0, 1, 1], [], []>} : vector<16x32xf32>, vector<32x96xf32>, vector<16x96xf32> -> vector<16x96xf32>
    %42 = vector.broadcast %1 : vector<1x96xf32> to vector<16x96xf32>
    %43 = arith.addf %41, %42 : vector<16x96xf32>
    %44 = vector.extract_strided_slice %43 {offsets = [0, 0], sizes = [16, 32], strides = [1, 1]} : vector<16x96xf32> to vector<16x32xf32>
    %45 = vector.extract_strided_slice %43 {offsets = [0, 32], sizes = [16, 32], strides = [1, 1]} : vector<16x96xf32> to vector<16x32xf32>
    %46 = vector.extract_strided_slice %43 {offsets = [0, 64], sizes = [16, 32], strides = [1, 1]} : vector<16x96xf32> to vector<16x32xf32>
    %cst_11 = arith.constant dense<0.000000e+00> : vector<16x16xf32>
    %47 = tpu.matmul %44, %45, %cst_11 {dimension_numbers = #tpu.dot_dimension_numbers<[1], [1], [0], [0], [0, 0, 1, 0], [], []>} : vector<16x32xf32>, vector<16x32xf32>, vector<16x16xf32> -> vector<16x16xf32>
    %cst_12 = arith.constant 0.176776692 : f32
    %48 = vector.broadcast %cst_12 : f32 to vector<16x16xf32>
    %49 = arith.mulf %47, %48 : vector<16x16xf32>
    %c0_13 = arith.constant 0 : index
    %c0_14 = arith.constant 0 : index
    %50 = vector.load %arg1[%c0_13, %c0_14] : memref<16x16xf32, #tpu.memory_space<vmem>>, vector<16x16xf32>
    %51 = arith.addf %49, %50 : vector<16x16xf32>
    %cst_15 = arith.constant dense<0xFF800000> : vector<16xf32>
    %52 = vector.multi_reduction <maximumf>, %51, %cst_15 [1] : vector<16x16xf32> to vector<16xf32>
    %53 = vector.shape_cast %52 : vector<16xf32> to vector<16x1xf32>
    %54 = vector.broadcast %53 : vector<16x1xf32> to vector<16x16xf32>
    %55 = arith.subf %51, %54 : vector<16x16xf32>
    %56 = math.exp %55 : vector<16x16xf32>
    %cst_16 = arith.constant dense<0.000000e+00> : vector<16xf32>
    %57 = vector.multi_reduction <add>, %56, %cst_16 [1] : vector<16x16xf32> to vector<16xf32>
    %58 = vector.shape_cast %57 : vector<16xf32> to vector<16x1xf32>
    %59 = vector.broadcast %58 : vector<16x1xf32> to vector<16x16xf32>
    %60 = arith.divf %56, %59 : vector<16x16xf32>
    %cst_17 = arith.constant dense<0.000000e+00> : vector<16x32xf32>
    %61 = tpu.matmul %60, %46, %cst_17 {dimension_numbers = #tpu.dot_dimension_numbers<[1], [0], [0], [1], [0, 0, 1, 1], [], []>} : vector<16x16xf32>, vector<16x32xf32>, vector<16x32xf32> -> vector<16x32xf32>
    %c0_18 = arith.constant 0 : index
    %c0_19 = arith.constant 0 : index
    %62 = vector.load %arg4[%c0_18, %c0_19] : memref<32x32xf32, #tpu.memory_space<vmem>>, vector<32x32xf32>
    %cst_20 = arith.constant dense<0.000000e+00> : vector<16x32xf32>
    %63 = tpu.matmul %61, %62, %cst_20 {dimension_numbers = #tpu.dot_dimension_numbers<[1], [0], [0], [1], [0, 0, 1, 1], [], []>} : vector<16x32xf32>, vector<32x32xf32>, vector<16x32xf32> -> vector<16x32xf32>
    %64 = vector.broadcast %2 : vector<1x32xf32> to vector<16x32xf32>
    %65 = arith.addf %63, %64 : vector<16x32xf32>
    %66 = arith.addf %39, %65 : vector<16x32xf32>
    %cst_21 = arith.constant dense<0.000000e+00> : vector<16xf32>
    %67 = vector.multi_reduction <add>, %66, %cst_21 [1] : vector<16x32xf32> to vector<16xf32>
    %68 = vector.shape_cast %67 : vector<16xf32> to vector<16x1xf32>
    %cst_22 = arith.constant 3.200000e+01 : f32
    %69 = vector.broadcast %cst_22 : f32 to vector<16x1xf32>
    %70 = arith.divf %68, %69 : vector<16x1xf32>
    %71 = arith.mulf %66, %66 : vector<16x32xf32>
    %cst_23 = arith.constant dense<0.000000e+00> : vector<16xf32>
    %72 = vector.multi_reduction <add>, %71, %cst_23 [1] : vector<16x32xf32> to vector<16xf32>
    %73 = vector.shape_cast %72 : vector<16xf32> to vector<16x1xf32>
    %cst_24 = arith.constant 3.200000e+01 : f32
    %74 = vector.broadcast %cst_24 : f32 to vector<16x1xf32>
    %75 = arith.divf %73, %74 : vector<16x1xf32>
    %76 = arith.mulf %70, %70 : vector<16x1xf32>
    %77 = arith.subf %75, %76 : vector<16x1xf32>
    %78 = vector.broadcast %70 : vector<16x1xf32> to vector<16x32xf32>
    %79 = arith.subf %66, %78 : vector<16x32xf32>
    %cst_25 = arith.constant 9.99999996E-13 : f32
    %80 = vector.broadcast %cst_25 : f32 to vector<16x1xf32>
    %81 = arith.addf %77, %80 : vector<16x1xf32>
    %82 = math.rsqrt %81 : vector<16x1xf32>
    %83 = vector.broadcast %82 : vector<16x1xf32> to vector<16x32xf32>
    %84 = arith.mulf %79, %83 : vector<16x32xf32>
    %85 = vector.broadcast %3 : vector<1x32xf32> to vector<16x32xf32>
    %86 = arith.mulf %84, %85 : vector<16x32xf32>
    %87 = vector.broadcast %4 : vector<1x32xf32> to vector<16x32xf32>
    %88 = arith.addf %86, %87 : vector<16x32xf32>
    %c0_26 = arith.constant 0 : index
    %c0_27 = arith.constant 0 : index
    %89 = vector.load %arg5[%c0_26, %c0_27] : memref<32x64xf32, #tpu.memory_space<vmem>>, vector<32x64xf32>
    %cst_28 = arith.constant dense<0.000000e+00> : vector<16x64xf32>
    %90 = tpu.matmul %88, %89, %cst_28 {dimension_numbers = #tpu.dot_dimension_numbers<[1], [0], [0], [1], [0, 0, 1, 1], [], []>} : vector<16x32xf32>, vector<32x64xf32>, vector<16x64xf32> -> vector<16x64xf32>
    %91 = vector.broadcast %5 : vector<1x64xf32> to vector<16x64xf32>
    %92 = arith.addf %90, %91 : vector<16x64xf32>
    %93 = arith.mulf %92, %92 : vector<16x64xf32>
    %94 = arith.mulf %92, %93 : vector<16x64xf32>
    %cst_29 = arith.constant 4.471500e-02 : f32
    %95 = vector.broadcast %cst_29 : f32 to vector<16x64xf32>
    %96 = arith.mulf %95, %94 : vector<16x64xf32>
    %97 = arith.addf %92, %96 : vector<16x64xf32>
    %cst_30 = arith.constant 0.797884583 : f32
    %98 = vector.broadcast %cst_30 : f32 to vector<16x64xf32>
    %99 = arith.mulf %98, %97 : vector<16x64xf32>
    %100 = math.tanh %99 : vector<16x64xf32>
    %cst_31 = arith.constant 1.000000e+00 : f32
    %101 = vector.broadcast %cst_31 : f32 to vector<16x64xf32>
    %102 = arith.addf %101, %100 : vector<16x64xf32>
    %cst_32 = arith.constant 5.000000e-01 : f32
    %103 = vector.broadcast %cst_32 : f32 to vector<16x64xf32>
    %104 = arith.mulf %103, %102 : vector<16x64xf32>
    %105 = arith.mulf %92, %104 : vector<16x64xf32>
    %c0_33 = arith.constant 0 : index
    %c0_34 = arith.constant 0 : index
    %106 = vector.load %arg6[%c0_33, %c0_34] : memref<64x32xf32, #tpu.memory_space<vmem>>, vector<64x32xf32>
    %cst_35 = arith.constant dense<0.000000e+00> : vector<16x32xf32>
    %107 = tpu.matmul %105, %106, %cst_35 {dimension_numbers = #tpu.dot_dimension_numbers<[1], [0], [0], [1], [0, 0, 1, 1], [], []>} : vector<16x64xf32>, vector<64x32xf32>, vector<16x32xf32> -> vector<16x32xf32>
    %108 = vector.broadcast %6 : vector<1x32xf32> to vector<16x32xf32>
    %109 = arith.addf %107, %108 : vector<16x32xf32>
    %110 = arith.addf %88, %109 : vector<16x32xf32>
    %cst_36 = arith.constant dense<0.000000e+00> : vector<16xf32>
    %111 = vector.multi_reduction <add>, %110, %cst_36 [1] : vector<16x32xf32> to vector<16xf32>
    %112 = vector.shape_cast %111 : vector<16xf32> to vector<16x1xf32>
    %cst_37 = arith.constant 3.200000e+01 : f32
    %113 = vector.broadcast %cst_37 : f32 to vector<16x1xf32>
    %114 = arith.divf %112, %113 : vector<16x1xf32>
    %115 = arith.mulf %110, %110 : vector<16x32xf32>
    %cst_38 = arith.constant dense<0.000000e+00> : vector<16xf32>
    %116 = vector.multi_reduction <add>, %115, %cst_38 [1] : vector<16x32xf32> to vector<16xf32>
    %117 = vector.shape_cast %116 : vector<16xf32> to vector<16x1xf32>
    %cst_39 = arith.constant 3.200000e+01 : f32
    %118 = vector.broadcast %cst_39 : f32 to vector<16x1xf32>
    %119 = arith.divf %117, %118 : vector<16x1xf32>
    %120 = arith.mulf %114, %114 : vector<16x1xf32>
    %121 = arith.subf %119, %120 : vector<16x1xf32>
    %122 = vector.broadcast %114 : vector<16x1xf32> to vector<16x32xf32>
    %123 = arith.subf %110, %122 : vector<16x32xf32>
    %cst_40 = arith.constant 9.99999996E-13 : f32
    %124 = vector.broadcast %cst_40 : f32 to vector<16x1xf32>
    %125 = arith.addf %121, %124 : vector<16x1xf32>
    %126 = math.rsqrt %125 : vector<16x1xf32>
    %127 = vector.broadcast %126 : vector<16x1xf32> to vector<16x32xf32>
    %128 = arith.mulf %123, %127 : vector<16x32xf32>
    %129 = vector.broadcast %7 : vector<1x32xf32> to vector<16x32xf32>
    %130 = arith.mulf %128, %129 : vector<16x32xf32>
    %131 = vector.broadcast %8 : vector<1x32xf32> to vector<16x32xf32>
    %132 = arith.addf %130, %131 : vector<16x32xf32>
    %133 = tpu.iota {dimensions = array<i32: 1>} : vector<2x16xi32>
    %134 = tpu.iota {dimensions = array<i32: 0>} : vector<2x16xi32>
    %c8_i32_41 = arith.constant 8 : i32
    %135 = vector.broadcast %c8_i32_41 : i32 to vector<2x16xi32>
    %136 = arith.muli %134, %135 : vector<2x16xi32>
    %137 = arith.cmpi eq, %133, %136 : vector<2x16xi32>
    %138 = arith.extui %137 : vector<2x16xi1> to vector<2x16xi32>
    %139 = arith.sitofp %138 : vector<2x16xi32> to vector<2x16xf32>
    %cst_42 = arith.constant dense<0.000000e+00> : vector<2x32xf32>
    %140 = tpu.matmul %139, %132, %cst_42 {dimension_numbers = #tpu.dot_dimension_numbers<[1], [0], [0], [1], [0, 0, 1, 1], [], []>} : vector<2x16xf32>, vector<16x32xf32>, vector<2x32xf32> -> vector<2x32xf32>
    %c0_43 = arith.constant 0 : index
    %c0_44 = arith.constant 0 : index
    %141 = vector.load %arg7[%c0_43, %c0_44] : memref<32x128xf32, #tpu.memory_space<vmem>>, vector<32x128xf32>
    %cst_45 = arith.constant dense<0.000000e+00> : vector<2x128xf32>
    %142 = tpu.matmul %140, %141, %cst_45 {dimension_numbers = #tpu.dot_dimension_numbers<[1], [0], [0], [1], [0, 0, 1, 1], [], []>} : vector<2x32xf32>, vector<32x128xf32>, vector<2x128xf32> -> vector<2x128xf32>
    %143 = vector.broadcast %9 : vector<1x128xf32> to vector<2x128xf32>
    %144 = arith.addf %142, %143 : vector<2x128xf32>
    %c0_46 = arith.constant 0 : index
    %c0_47 = arith.constant 0 : index
    %145 = vector.load %arg9[%c0_46, %c0_47] : memref<2x128xf32, #tpu.memory_space<vmem>>, vector<2x128xf32>
    tpu.vector_store %arg9[%c0_46, %c0_47], %144 {strides = array<i32>} : memref<2x128xf32, #tpu.memory_space<vmem>>, vector<2x128xf32>,
    return
  }
}

</mosaic_0001>

<llo_original>
// kernel: _lambda_.1
$region0: #{_lambda_.1}
  #allocation0 [shape = 'u32[]', space=smem, size = 0x4, offset = 0x4, fixed_abs, tag = 'smem constant byte address 0x4 - core index']
  #allocation1 [shape = 'u32[144,128]{1,0:T(1,128)}', space=vmem, size = 0x12000, scoped, tag = 'internal scratch']
  %s0 = inlined_call_operand.vmem [shape: s32[16,1], index: 0, kind: input, shape index: {}]
  %s1 = inlined_call_operand.vmem [shape: f32[16,16], index: 1, kind: input, shape index: {}]
  %s2 = inlined_call_operand.hbm [shape: f32[256,32], index: 2, kind: input, shape index: {}]
  %s3 = inlined_call_operand.hbm [shape: f32[32,96], index: 3, kind: input, shape index: {}]
  %s4 = inlined_call_operand.hbm [shape: f32[32,32], index: 4, kind: input, shape index: {}]
  %s5 = inlined_call_operand.hbm [shape: f32[32,64], index: 5, kind: input, shape index: {}]
  %s6 = inlined_call_operand.vmem [shape: f32[64,32], index: 6, kind: input, shape index: {}]
  %s7 = inlined_call_operand.hbm [shape: f32[32,128], index: 7, kind: input, shape index: {}]
  %s8 = inlined_call_operand.hbm [shape: f32[9,128], index: 8, kind: input, shape index: {}]
  %s9 = inlined_call_operand.vmem [shape: f32[2,128], index: 9, kind: output, shape index: {}]
  %s10 = sld [smem:[#allocation0]]
  $region70: #{_lambda_.1} parent=0
    _
  %s12 = ssub.s32 1, %s10
  %s13 = scalar_select 0, %s12, %s10
  $region1: #{_lambda_.1} parent=0
    #allocation2 [shape = 'u8[131072]{0}', space=vmem, size = 0x20000, scoped, tag = 'input window, operand 2, single buffered']
    #allocation3 [shape = 's32[1]{0}', space=sflag, size = 0x4, scoped, tag = 'scoped memory for _lambda_.1']
    #allocation4 [shape = 'u8[16384]{0}', space=vmem, size = 0x4000, scoped, tag = 'input window, operand 3, single buffered']
    #allocation5 [shape = 's32[1]{0}', space=sflag, size = 0x4, scoped, tag = 'scoped memory for _lambda_.1']
    #allocation6 [shape = 'u8[16384]{0}', space=vmem, size = 0x4000, scoped, tag = 'input window, operand 4, single buffered']
    #allocation7 [shape = 'u8[16384]{0}', space=vmem, size = 0x4000, scoped, tag = 'input window, operand 5, single buffered']
    #allocation8 [shape = 's32[1]{0}', space=sflag, size = 0x4, scoped, tag = 'scoped memory for _lambda_.1']
    #allocation9 [shape = 'u8[16384]{0}', space=vmem, size = 0x4000, scoped, tag = 'input window, operand 7, single buffered']
    #allocation10 [shape = 'u8[8192]{0}', space=vmem, size = 0x2000, scoped, tag = 'input window, operand 8, single buffered']
    #allocation11 [shape = 's32[1]{0}', space=sflag, size = 0x4, scoped, tag = 'scoped memory for _lambda_.1']
    %14 = vsyncpa [#allocation3], 0
    %15 = vsyncpa [#allocation5], 0
    %16 = vsyncpa [#allocation8], 0
    %17 = vsyncpa [#allocation11], 0
    // Predicated region
    $region2: #{_lambda_.1} parent=1 // pred_check
      _
    $region3: #{_lambda_.1} parent=1 // pred_check_branch
      %19 = sbr.rel (0) target = $region5
    $region4: #{_lambda_.1} parent=1 // pred_region
      _
    $region5: #{_lambda_.1} parent=1 // pred_fallthru
      _
    // Predicated region
    $region6: #{_lambda_.1} parent=1 // pred_check
      _
    $region7: #{_lambda_.1} parent=1 // pred_check_branch
      %21 = sbr.rel (0) target = $region9
    $region8: #{_lambda_.1} parent=1 // pred_region
      _
    $region9: #{_lambda_.1} parent=1 // pred_fallthru
      _
    // Predicated region
    $region10: #{_lambda_.1} parent=1 // pred_check
      _
    $region11: #{_lambda_.1} parent=1 // pred_check_branch
      %23 = sbr.rel (0) target = $region13
    $region12: #{_lambda_.1} parent=1 // pred_region
      %s25 = ssub.s32 4096, 4096
      %26 = vsyncadd [#allocation3], %s25
      %s27 = sshll.u32 [#allocation2], 4
      %s28 = int_to_ptr.vmem [resolvable:$true] %s27
      %33 = dma.hbm_to_vmem [thread:$0]  %s2, 4096, %s28, [#allocation3], 128, 128, 8
    $region13: #{_lambda_.1} parent=1 // pred_fallthru
      _
    // Predicated region
    $region14: #{_lambda_.1} parent=1 // pred_check
      _
    $region15: #{_lambda_.1} parent=1 // pred_check_branch
      %35 = sbr.rel (0) target = $region17
    $region16: #{_lambda_.1} parent=1 // pred_region
      %s37 = ssub.s32 512, 512
      %38 = vsyncadd [#allocation5], %s37
      %s39 = sshll.u32 [#allocation4], 4
      %s40 = int_to_ptr.vmem [resolvable:$true] %s39
      %45 = dma.hbm_to_vmem [thread:$0]  %s3, 512, %s40, [#allocation5], 128, 128, 8
    $region17: #{_lambda_.1} parent=1 // pred_fallthru
      _
    // Predicated region
    $region18: #{_lambda_.1} parent=1 // pred_check
      _
    $region19: #{_lambda_.1} parent=1 // pred_check_branch
      %47 = sbr.rel (0) target = $region21
    $region20: #{_lambda_.1} parent=1 // pred_region
      %s49 = ssub.s32 512, 512
      %50 = vsyncadd [#allocation5], %s49
      %s51 = sshll.u32 [#allocation6], 4
      %s52 = int_to_ptr.vmem [resolvable:$true] %s51
      %57 = dma.hbm_to_vmem [thread:$0]  %s4, 512, %s52, [#allocation5], 128, 128, 8
    $region21: #{_lambda_.1} parent=1 // pred_fallthru
      _
    // Predicated region
    $region22: #{_lambda_.1} parent=1 // pred_check
      _
    $region23: #{_lambda_.1} parent=1 // pred_check_branch
      %59 = sbr.rel (0) target = $region25
    $region24: #{_lambda_.1} parent=1 // pred_region
      %s61 = ssub.s32 512, 512
      %62 = vsyncadd [#allocation8], %s61
      %s63 = sshll.u32 [#allocation7], 4
      %s64 = int_to_ptr.vmem [resolvable:$true] %s63
      %69 = dma.hbm_to_vmem [thread:$0]  %s5, 512, %s64, [#allocation8], 128, 128, 8
    $region25: #{_lambda_.1} parent=1 // pred_fallthru
      _
    // Predicated region
    $region26: #{_lambda_.1} parent=1 // pred_check
      _
    $region27: #{_lambda_.1} parent=1 // pred_check_branch
      %71 = sbr.rel (0) target = $region29
    $region28: #{_lambda_.1} parent=1 // pred_region
      _
    $region29: #{_lambda_.1} parent=1 // pred_fallthru
      _
    // Predicated region
    $region30: #{_lambda_.1} parent=1 // pred_check
      _
    $region31: #{_lambda_.1} parent=1 // pred_check_branch
      %73 = sbr.rel (0) target = $region33
    $region32: #{_lambda_.1} parent=1 // pred_region
      %s75 = ssub.s32 512, 512
      %76 = vsyncadd [#allocation8], %s75
      %s77 = sshll.u32 [#allocation9], 4
      %s78 = int_to_ptr.vmem [resolvable:$true] %s77
      %83 = dma.hbm_to_vmem [thread:$0]  %s7, 512, %s78, [#allocation8], 128, 128, 8
    $region33: #{_lambda_.1} parent=1 // pred_fallthru
      _
    // Predicated region
    $region34: #{_lambda_.1} parent=1 // pred_check
      _
    $region35: #{_lambda_.1} parent=1 // pred_check_branch
      %85 = sbr.rel (0) target = $region37
    $region36: #{_lambda_.1} parent=1 // pred_region
      %s87 = ssub.s32 256, 256
      %88 = vsyncadd [#allocation11], %s87
      %s89 = sshll.u32 [#allocation10], 4
      %s90 = int_to_ptr.vmem [resolvable:$true] %s89
      %95 = dma.hbm_to_vmem [thread:$0]  %s8, 256, %s90, [#allocation11], 128, 128, 8
    $region37: #{_lambda_.1} parent=1 // pred_fallthru
      _
    // Predicated region
    $region38: #{_lambda_.1} parent=1 // pred_check
      _
    $region39: #{_lambda_.1} parent=1 // pred_check_branch
      %97 = sbr.rel (0) target = $region41
    $region40: #{_lambda_.1} parent=1 // pred_region
      %98 = dma.done [#allocation3], 4096
    $region41: #{_lambda_.1} parent=1 // pred_fallthru
      _
    // Predicated region
    $region42: #{_lambda_.1} parent=1 // pred_check
      _
    $region43: #{_lambda_.1} parent=1 // pred_check_branch
      %100 = sbr.rel (0) target = $region45
    $region44: #{_lambda_.1} parent=1 // pred_region
      %101 = dma.done [#allocation5], 512
    $region45: #{_lambda_.1} parent=1 // pred_fallthru
      _
    // Predicated region
    $region46: #{_lambda_.1} parent=1 // pred_check
      _
    $region47: #{_lambda_.1} parent=1 // pred_check_branch
      %103 = sbr.rel (0) target = $region49
    $region48: #{_lambda_.1} parent=1 // pred_region
      %104 = dma.done [#allocation5], 512
    $region49: #{_lambda_.1} parent=1 // pred_fallthru
      _
    // Predicated region
    $region50: #{_lambda_.1} parent=1 // pred_check
      _
    $region51: #{_lambda_.1} parent=1 // pred_check_branch
      %106 = sbr.rel (0) target = $region53
    $region52: #{_lambda_.1} parent=1 // pred_region
      %107 = dma.done [#allocation8], 512
    $region53: #{_lambda_.1} parent=1 // pred_fallthru
      _
    // Predicated region
    $region54: #{_lambda_.1} parent=1 // pred_check
      _
    $region55: #{_lambda_.1} parent=1 // pred_check_branch
      %109 = sbr.rel (0) target = $region57
    $region56: #{_lambda_.1} parent=1 // pred_region
      %110 = dma.done [#allocation8], 512
    $region57: #{_lambda_.1} parent=1 // pred_fallthru
      _
    // Predicated region
    $region58: #{_lambda_.1} parent=1 // pred_check
      _
    $region59: #{_lambda_.1} parent=1 // pred_check_branch
      %112 = sbr.rel (0) target = $region61
    $region60: #{_lambda_.1} parent=1 // pred_region
      %113 = dma.done [#allocation11], 256
    $region61: #{_lambda_.1} parent=1 // pred_fallthru
      _
    %v114 = vld [vmem:[#allocation10] sm:$0xff]
    %v115 = vld [vmem:[#allocation10 + $0x8] sm:$0x1]
    %v116 = vld [vmem:[%s0] sm:$0xff]
    %v117 = vld [vmem:[%s0 + $0x8] sm:$0xff]
    %v118 = vlaneseq
    %v119 = vshrl.u32 %v118, 7
    %v120 = vadd.s32 %v119, 8
    %vm121 = vcmp.lt.s32.totalorder %v119, 0
    %v122 = vsub.s32 0, %v119
    %v123 = vsel %vm121, %v122, %v119
    %v124 = vshrl.u32 %v123, 3
    %v125 = vand.u32 %v123, 7
    %v126 = vsub.s32 0, %v125
    %v127 = vsel %vm121, %v126, %v125
    %vm128 = vcmp.lt.s32.totalorder %v120, 0
    %v129 = vsub.s32 0, %v120
    %v130 = vsel %vm128, %v129, %v120
    %v131 = vshrl.u32 %v130, 3
    %v132 = vand.u32 %v130, 7
    %v133 = vsub.s32 0, %v132
    %v134 = vsel %vm128, %v133, %v132
    %vm135 = vcmp.ne.s32.totalorder %v127, 0
    %vm136 = vcmp.ne.s32.totalorder %v134, 0
    %vm137 = vcmp.lt.s32.totalorder %v127, 0
    %vm138 = vcmp.lt.s32.totalorder %v134, 0
    %vm139 = vmand %vm137, %vm135
    %vm140 = vmand %vm138, %vm136
    %v141 = vadd.s32 %v127, 8
    %v142 = vadd.s32 %v134, 8
    %v143 = vsel %vm139, %v141, %v127
    %v144 = vsel %vm140, %v142, %v134
    %v145 = vadd.s32 %v143, 128
    %v146 = vadd.s32 %v144, 128
    %v147 = vlaneseq
    %v148 = vand.u32 %v147, 127
    %v149 = vadd.s32 %v148, 128
    %150 = vset.pattern.permute.xlu0 0
    %151 = vperm.xlu0 %150, %v116
    %v152 = vpop.permute.xlu0 %151
    %153 = vset.pattern.permute.xlu0 0
    %154 = vperm.xlu0 %153, %v117
    %v155 = vpop.permute.xlu0 %154
    %vm156 = vcmp.eq.s32.totalorder %v148, %v152
    %vm157 = vcmp.eq.s32.totalorder %v149, %v152
    %vm158 = vcmp.eq.s32.totalorder %v148, %v155
    %vm159 = vcmp.eq.s32.totalorder %v149, %v155
    %vm160 = vcmp.eq.s32.totalorder %v148, %v145
    %vm161 = vcmp.eq.s32.totalorder %v149, %v145
    %vm162 = vcmp.eq.s32.totalorder %v148, %v146
    %vm163 = vcmp.eq.s32.totalorder %v149, %v146
    %vm164 = vmor %vm156, %vm160
    %vm165 = vmor %vm157, %vm161
    %vm166 = vmor %vm158, %vm162
    %vm167 = vmor %vm159, %vm163
    %v168 = vsel %vm164, 1, 0
    %v169 = vsel %vm165, 1, 0
    %v170 = vsel %vm166, 1, 0
    %v171 = vsel %vm167, 1, 0
    %v172 = vcvt.s32.f32 %v168
    %v173 = vcvt.s32.f32 %v169
    %v174 = vcvt.s32.f32 %v170
    %v175 = vcvt.s32.f32 %v171
    %v176 = vld [vmem:[#allocation2] sm:$0xff]
    %v177 = vld [vmem:[#allocation2 + $0x8] sm:$0xff]
    %v178 = vld [vmem:[#allocation2 + $0x10] sm:$0xff]
    %v179 = vld [vmem:[#allocation2 + $0x18] sm:$0xff]
    %v180 = vld [vmem:[#allocation2 + $0x20] sm:$0xff]
    %v181 = vld [vmem:[#allocation2 + $0x28] sm:$0xff]
    %v182 = vld [vmem:[#allocation2 + $0x30] sm:$0xff]
    %v183 = vld [vmem:[#allocation2 + $0x38] sm:$0xff]
    %v184 = vld [vmem:[#allocation2 + $0x40] sm:$0xff]
    %v185 = vld [vmem:[#allocation2 + $0x48] sm:$0xff]
    %v186 = vld [vmem:[#allocation2 + $0x50] sm:$0xff]
    %v187 = vld [vmem:[#allocation2 + $0x58] sm:$0xff]
    %v188 = vld [vmem:[#allocation2 + $0x60] sm:$0xff]
    %v189 = vld [vmem:[#allocation2 + $0x68] sm:$0xff]
    %v190 = vld [vmem:[#allocation2 + $0x70] sm:$0xff]
    %v191 = vld [vmem:[#allocation2 + $0x78] sm:$0xff]
    %v192 = vld [vmem:[#allocation2 + $0x80] sm:$0xff]
    %v193 = vld [vmem:[#allocation2 + $0x88] sm:$0xff]
    %v194 = vld [vmem:[#allocation2 + $0x90] sm:$0xff]
    %v195 = vld [vmem:[#allocation2 + $0x98] sm:$0xff]
    %v196 = vld [vmem:[#allocation2 + $0xa0] sm:$0xff]
    %v197 = vld [vmem:[#allocation2 + $0xa8] sm:$0xff]
    %v198 = vld [vmem:[#allocation2 + $0xb0] sm:$0xff]
    %v199 = vld [vmem:[#allocation2 + $0xb8] sm:$0xff]
    %v200 = vld [vmem:[#allocation2 + $0xc0] sm:$0xff]
    %v201 = vld [vmem:[#allocation2 + $0xc8] sm:$0xff]
    %v202 = vld [vmem:[#allocation2 + $0xd0] sm:$0xff]
    %v203 = vld [vmem:[#allocation2 + $0xd8] sm:$0xff]
    %v204 = vld [vmem:[#allocation2 + $0xe0] sm:$0xff]
    %v205 = vld [vmem:[#allocation2 + $0xe8] sm:$0xff]
    %v206 = vld [vmem:[#allocation2 + $0xf0] sm:$0xff]
    %v207 = vld [vmem:[#allocation2 + $0xf8] sm:$0xff]
    %208 = vmatprep.subr.mxu0 0.0
    %209 = vmatpush1.msra.mxu0 %v176
    %210 = vmatprep.subr.mxu0 0.0
    %211 = vmatpush1.msra.mxu0 %v177
    %212 = vmatprep.subr.mxu0 0.0
    %213 = vmatpush1.msra.mxu0 %v178
    %214 = vmatprep.subr.mxu0 0.0
    %215 = vmatpush1.msra.mxu0 %v179
    %216 = vmatprep.subr.mxu0 0.0
    %217 = vmatpush1.msra.mxu0 %v180
    %218 = vmatprep.subr.mxu0 0.0
    %219 = vmatpush1.msra.mxu0 %v181
    %220 = vmatprep.subr.mxu0 0.0
    %221 = vmatpush1.msra.mxu0 %v182
    %222 = vmatprep.subr.mxu0 0.0
    %223 = vmatpush1.msra.mxu0 %v183
    %224 = vmatprep.subr.mxu0 0.0
    %225 = vmatpush1.msra.mxu0 %v184
    %226 = vmatprep.subr.mxu0 0.0
    %227 = vmatpush1.msra.mxu0 %v185
    %228 = vmatprep.subr.mxu0 0.0
    %229 = vmatpush1.msra.mxu0 %v186
    %230 = vmatprep.subr.mxu0 0.0
    %231 = vmatpush1.msra.mxu0 %v187
    %232 = vmatprep.subr.mxu0 0.0
    %233 = vmatpush1.msra.mxu0 %v188
    %234 = vmatprep.subr.mxu0 0.0
    %235 = vmatpush1.msra.mxu0 %v189
    %236 = vmatprep.subr.mxu0 0.0
    %237 = vmatpush1.msra.mxu0 %v190
    %238 = vmatprep.subr.mxu0 0.0
    %239 = vmatpush1.msra.mxu0 %v191
    %240 = vmatprep.subr.mxu0 0.0
    %241 = vmatpush1.msra.mxu0 %v192
    %242 = vmatprep.subr.mxu0 0.0
    %243 = vmatpush1.msra.mxu0 %v193
    %244 = vmatprep.subr.mxu0 0.0
    %245 = vmatpush1.msra.mxu0 %v194
    %246 = vmatprep.subr.mxu0 0.0
    %247 = vmatpush1.msra.mxu0 %v195
    %248 = vmatprep.subr.mxu0 0.0
    %249 = vmatpush1.msra.mxu0 %v196
    %250 = vmatprep.subr.mxu0 0.0
    %251 = vmatpush1.msra.mxu0 %v197
    %252 = vmatprep.subr.mxu0 0.0
    %253 = vmatpush1.msra.mxu0 %v198
    %254 = vmatprep.subr.mxu0 0.0
    %255 = vmatpush1.msra.mxu0 %v199
    %256 = vmatprep.subr.mxu0 0.0
    %257 = vmatpush1.msra.mxu0 %v200
    %258 = vmatprep.subr.mxu0 0.0
    %259 = vmatpush1.msra.mxu0 %v201
    %260 = vmatprep.subr.mxu0 0.0
    %261 = vmatpush1.msra.mxu0 %v202
    %262 = vmatprep.subr.mxu0 0.0
    %263 = vmatpush1.msra.mxu0 %v203
    %264 = vmatprep.subr.mxu0 0.0
    %265 = vmatpush1.msra.mxu0 %v204
    %266 = vmatprep.subr.mxu0 0.0
    %267 = vmatpush1.msra.mxu0 %v205
    %268 = vmatprep.subr.mxu0 0.0
    %269 = vmatpush1.msra.mxu0 %v206
    %270 = vmatprep.subr.mxu0 0.0
    %271 = vmatpush1.msra.mxu0 %v207
    %272 = vmatprep.mubr.f32.mxu0 %v173
    %273 = vmatmul.mubr.f32.gmra.mrb[0].mxu0 %v172
    %v274 = vpop.f32.mrb[0].mxu0
    %v275 = vadd.f32 0.0, %v274
    %v276 = vpop.f32.mrb[0].mxu0
    %277 = vmatprep.mubr.f32.mxu0 %v175
    %278 = vmatmul.mubr.f32.gmra.mrb[0].mxu0 %v174
    %v279 = vpop.f32.mrb[0].mxu0
    %v280 = vadd.f32 0.0, %v279
    %v281 = vpop.f32.mrb[0].mxu0
    %282 = vdwg.mxu0
    %v283 = vld [vmem:[#allocation4] sm:$0xff]
    %v284 = vld [vmem:[#allocation4 + $0x8] sm:$0xff]
    %v285 = vld [vmem:[#allocation4 + $0x10] sm:$0xff]
    %v286 = vld [vmem:[#allocation4 + $0x18] sm:$0xff]
    %v287 = vlaneseq
    %v288 = vshrl.u32 %v287, 7
    %v289 = vsub.s32 0, %v288
    %v290 = vrot.slane %v114, %v289
    %vm291 = vcmask 261120
    %v293 = vsel %vm291, %v275, 0
    %v296 = vsel %vm291, %v280, 0
    %298 = vmatprep.subr.mxu0 0.0
    %299 = vmatpush1.msra.mxu0 %v283
    %300 = vmatprep.subr.mxu0 0.0
    %301 = vmatpush1.msra.mxu0 %v284
    %302 = vmatprep.subr.mxu0 0.0
    %303 = vmatpush1.msra.mxu0 %v285
    %304 = vmatprep.subr.mxu0 0.0
    %305 = vmatpush1.msra.mxu0 %v286
    %306 = vmatprep.subr.mxu0 0.0
    %307 = vmatpush1.msra.mxu0 0.0
    %308 = vmatprep.subr.mxu0 0.0
    %309 = vmatpush1.msra.mxu0 0.0
    %310 = vmatprep.subr.mxu0 0.0
    %311 = vmatpush1.msra.mxu0 0.0
    %312 = vmatprep.subr.mxu0 0.0
    %313 = vmatpush1.msra.mxu0 0.0
    %314 = vmatprep.subr.mxu0 0.0
    %315 = vmatpush1.msra.mxu0 0.0
    %316 = vmatprep.subr.mxu0 0.0
    %317 = vmatpush1.msra.mxu0 0.0
    %318 = vmatprep.subr.mxu0 0.0
    %319 = vmatpush1.msra.mxu0 0.0
    %320 = vmatprep.subr.mxu0 0.0
    %321 = vmatpush1.msra.mxu0 0.0
    %322 = vmatprep.subr.mxu0 0.0
    %323 = vmatpush1.msra.mxu0 0.0
    %324 = vmatprep.subr.mxu0 0.0
    %325 = vmatpush1.msra.mxu0 0.0
    %326 = vmatprep.subr.mxu0 0.0
    %327 = vmatpush1.msra.mxu0 0.0
    %328 = vmatprep.subr.mxu0 0.0
    %329 = vmatpush1.msra.mxu0 0.0
    %330 = vmatprep.subr.mxu0 0.0
    %331 = vmatpush1.msra.mxu0 0.0
    %332 = vmatprep.subr.mxu0 0.0
    %333 = vmatpush1.msra.mxu0 0.0
    %334 = vmatprep.subr.mxu0 0.0
    %335 = vmatpush1.msra.mxu0 0.0
    %336 = vmatprep.subr.mxu0 0.0
    %337 = vmatpush1.msra.mxu0 0.0
    %338 = vmatprep.subr.mxu0 0.0
    %339 = vmatpush1.msra.mxu0 0.0
    %340 = vmatprep.subr.mxu0 0.0
    %341 = vmatpush1.msra.mxu0 0.0
    %342 = vmatprep.subr.mxu0 0.0
    %343 = vmatpush1.msra.mxu0 0.0
    %344 = vmatprep.subr.mxu0 0.0
    %345 = vmatpush1.msra.mxu0 0.0
    %346 = vmatprep.subr.mxu0 0.0
    %347 = vmatpush1.msra.mxu0 0.0
    %348 = vmatprep.subr.mxu0 0.0
    %349 = vmatpush1.msra.mxu0 0.0
    %350 = vmatprep.subr.mxu0 0.0
    %351 = vmatpush1.msra.mxu0 0.0
    %352 = vmatprep.subr.mxu0 0.0
    %353 = vmatpush1.msra.mxu0 0.0
    %354 = vmatprep.subr.mxu0 0.0
    %355 = vmatpush1.msra.mxu0 0.0
    %356 = vmatprep.subr.mxu0 0.0
    %357 = vmatpush1.msra.mxu0 0.0
    %358 = vmatprep.subr.mxu0 0.0
    %359 = vmatpush1.msra.mxu0 0.0
    %360 = vmatprep.subr.mxu0 0.0
    %361 = vmatpush1.msra.mxu0 0.0
    %362 = vmatprep.mubr.f32.mxu0 0.0
    %363 = vmatmul.mubr.f32.gmra.mrb[0].mxu0 %v293
    %v364 = vpop.f32.mrb[0].mxu0
    %v365 = vadd.f32 %v290, %v364
    %v366 = vpop.f32.mrb[0].mxu0
    %367 = vmatprep.mubr.f32.mxu0 0.0
    %368 = vmatmul.mubr.f32.gmra.mrb[0].mxu0 %v296
    %v369 = vpop.f32.mrb[0].mxu0
    %v370 = vadd.f32 %v290, %v369
    %v371 = vpop.f32.mrb[0].mxu0
    %372 = vdwg.mxu0
    %375 = vrot.lane.b32.xlu0 %v365, 96
    %v376 = vpop.permute.xlu0 %375
    %377 = vrot.lane.b32.xlu0 %v370, 96
    %v378 = vpop.permute.xlu0 %377
    %v379 = vsel %vm291, %v365, 0
    %v381 = vsel %vm291, %v370, 0
    %v383 = vsel %vm291, %v376, 0
    %v385 = vsel %vm291, %v378, 0
    %387 = vmatprep.subr.mxu0 0.0
    %388 = vmatpush1.xpose.msra.mxu0 %v383
    %389 = vmatprep.subr.mxu0 0.0
    %390 = vmatpush1.xpose.msra.mxu0 %v385
    %391 = vmatprep.subr.mxu0 0.0
    %392 = vmatpush1.xpose.msra.mxu0 0.0
    %393 = vmatprep.subr.mxu0 0.0
    %394 = vmatpush1.xpose.msra.mxu0 0.0
    %395 = vmatprep.subr.mxu0 0.0
    %396 = vmatpush1.xpose.msra.mxu0 0.0
    %397 = vmatprep.subr.mxu0 0.0
    %398 = vmatpush1.xpose.msra.mxu0 0.0
    %399 = vmatprep.subr.mxu0 0.0
    %400 = vmatpush1.xpose.msra.mxu0 0.0
    %401 = vmatprep.subr.mxu0 0.0
    %402 = vmatpush1.xpose.msra.mxu0 0.0
    %403 = vmatprep.subr.mxu0 0.0
    %404 = vmatpush1.xpose.msra.mxu0 0.0
    %405 = vmatprep.subr.mxu0 0.0
    %406 = vmatpush1.xpose.msra.mxu0 0.0
    %407 = vmatprep.subr.mxu0 0.0
    %408 = vmatpush1.xpose.msra.mxu0 0.0
    %409 = vmatprep.subr.mxu0 0.0
    %410 = vmatpush1.xpose.msra.mxu0 0.0
    %411 = vmatprep.subr.mxu0 0.0
    %412 = vmatpush1.xpose.msra.mxu0 0.0
    %413 = vmatprep.subr.mxu0 0.0
    %414 = vmatpush1.xpose.msra.mxu0 0.0
    %415 = vmatprep.subr.mxu0 0.0
    %416 = vmatpush1.xpose.msra.mxu0 0.0
    %417 = vmatprep.subr.mxu0 0.0
    %418 = vmatpush1.xpose.msra.mxu0 0.0
    %419 = vmatprep.subr.mxu0 0.0
    %420 = vmatpush1.xpose.msra.mxu0 0.0
    %421 = vmatprep.subr.mxu0 0.0
    %422 = vmatpush1.xpose.msra.mxu0 0.0
    %423 = vmatprep.subr.mxu0 0.0
    %424 = vmatpush1.xpose.msra.mxu0 0.0
    %425 = vmatprep.subr.mxu0 0.0
    %426 = vmatpush1.xpose.msra.mxu0 0.0
    %427 = vmatprep.subr.mxu0 0.0
    %428 = vmatpush1.xpose.msra.mxu0 0.0
    %429 = vmatprep.subr.mxu0 0.0
    %430 = vmatpush1.xpose.msra.mxu0 0.0
    %431 = vmatprep.subr.mxu0 0.0
    %432 = vmatpush1.xpose.msra.mxu0 0.0
    %433 = vmatprep.subr.mxu0 0.0
    %434 = vmatpush1.xpose.msra.mxu0 0.0
    %435 = vmatprep.subr.mxu0 0.0
    %436 = vmatpush1.xpose.msra.mxu0 0.0
    %437 = vmatprep.subr.mxu0 0.0
    %438 = vmatpush1.xpose.msra.mxu0 0.0
    %439 = vmatprep.subr.mxu0 0.0
    %440 = vmatpush1.xpose.msra.mxu0 0.0
    %441 = vmatprep.subr.mxu0 0.0
    %442 = vmatpush1.xpose.msra.mxu0 0.0
    %443 = vmatprep.subr.mxu0 0.0
    %444 = vmatpush1.xpose.msra.mxu0 0.0
    %445 = vmatprep.subr.mxu0 0.0
    %446 = vmatpush1.xpose.msra.mxu0 0.0
    %447 = vmatprep.subr.mxu0 0.0
    %448 = vmatpush1.xpose.msra.mxu0 0.0
    %449 = vmatprep.subr.mxu0 0.0
    %450 = vmatpush1.xpose.msra.mxu0 0.0
    %451 = vmatprep.mubr.f32.mxu0 0.0
    %452 = vmatmul.mubr.f32.gmra.mrb[0].mxu0 %v379
    %v453 = vpop.f32.mrb[0].mxu0
    %v454 = vadd.f32 0.0, %v453
    %v455 = vpop.f32.mrb[0].mxu0
    %456 = vmatprep.mubr.f32.mxu0 0.0
    %457 = vmatmul.mubr.f32.gmra.mrb[0].mxu0 %v381
    %v458 = vpop.f32.mrb[0].mxu0
    %v459 = vadd.f32 0.0, %v458
    %v460 = vpop.f32.mrb[0].mxu0
    %461 = vdwg.mxu0
    %v462 = vmul.f32 %v454, 0.17677669
    %v463 = vmul.f32 %v459, 0.17677669
    %v464 = vld [vmem:[%s1] sm:$0xff]
    %v465 = vld [vmem:[%s1 + $0x8] sm:$0xff]
    %v466 = vadd.f32 %v462, %v464
    %v467 = vadd.f32 %v463, %v465
    %vm468 = vcmask 130048
    %v469 = vsel %vm468, %v466, -inf
    %470 = vmax.xlane.f32.xlu0 %v469
    %v471 = vpop.xlane.xlu0 %470
    %v472 = vsel %vm468, %v467, -inf
    %473 = vmax.xlane.f32.xlu0 %v472
    %v474 = vpop.xlane.xlu0 %473
    %v475 = vsub.f32 %v466, %v471
    %v476 = vsub.f32 %v467, %v474
    %v477 = vmul.f32 %v475, 1.442695
    %v478 = vpow.pop %v477
    %v479 = vmul.f32 %v476, 1.442695
    %v480 = vpow.pop %v479
    %v481 = vsel %vm468, %v478, 0.0
    %482 = vadd.xlane.f32.xlu0 %v481
    %v483 = vpop.xlane.xlu0 %482
    %v484 = vsel %vm468, %v480, 0.0
    %485 = vadd.xlane.f32.xlu0 %v484
    %v486 = vpop.xlane.xlu0 %485
    %v487 = vrcp.pop %v483
    %v488 = vmul.f32 %v478, %v487
    %v489 = vrcp.pop %v486
    %v490 = vmul.f32 %v480, %v489
    %491 = vrot.lane.b32.xlu0 %v365, 64
    %v492 = vpop.permute.xlu0 %491
    %493 = vrot.lane.b32.xlu0 %v370, 64
    %v494 = vpop.permute.xlu0 %493
    %v498 = vsel %vm468, %v488, 0
    %v501 = vsel %vm468, %v490, 0
    %503 = vmatprep.subr.mxu0 0.0
    %504 = vmatpush1.msra.mxu0 %v492
    %505 = vmatprep.subr.mxu0 0.0
    %506 = vmatpush1.msra.mxu0 %v494
    %507 = vmatprep.subr.mxu0 0.0
    %508 = vmatpush1.msra.mxu0 0.0
    %509 = vmatprep.subr.mxu0 0.0
    %510 = vmatpush1.msra.mxu0 0.0
    %511 = vmatprep.subr.mxu0 0.0
    %512 = vmatpush1.msra.mxu0 0.0
    %513 = vmatprep.subr.mxu0 0.0
    %514 = vmatpush1.msra.mxu0 0.0
    %515 = vmatprep.subr.mxu0 0.0
    %516 = vmatpush1.msra.mxu0 0.0
    %517 = vmatprep.subr.mxu0 0.0
    %518 = vmatpush1.msra.mxu0 0.0
    %519 = vmatprep.subr.mxu0 0.0
    %520 = vmatpush1.msra.mxu0 0.0
    %521 = vmatprep.subr.mxu0 0.0
    %522 = vmatpush1.msra.mxu0 0.0
    %523 = vmatprep.subr.mxu0 0.0
    %524 = vmatpush1.msra.mxu0 0.0
    %525 = vmatprep.subr.mxu0 0.0
    %526 = vmatpush1.msra.mxu0 0.0
    %527 = vmatprep.subr.mxu0 0.0
    %528 = vmatpush1.msra.mxu0 0.0
    %529 = vmatprep.subr.mxu0 0.0
    %530 = vmatpush1.msra.mxu0 0.0
    %531 = vmatprep.subr.mxu0 0.0
    %532 = vmatpush1.msra.mxu0 0.0
    %533 = vmatprep.subr.mxu0 0.0
    %534 = vmatpush1.msra.mxu0 0.0
    %535 = vmatprep.subr.mxu0 0.0
    %536 = vmatpush1.msra.mxu0 0.0
    %537 = vmatprep.subr.mxu0 0.0
    %538 = vmatpush1.msra.mxu0 0.0
    %539 = vmatprep.subr.mxu0 0.0
    %540 = vmatpush1.msra.mxu0 0.0
    %541 = vmatprep.subr.mxu0 0.0
    %542 = vmatpush1.msra.mxu0 0.0
    %543 = vmatprep.subr.mxu0 0.0
    %544 = vmatpush1.msra.mxu0 0.0
    %545 = vmatprep.subr.mxu0 0.0
    %546 = vmatpush1.msra.mxu0 0.0
    %547 = vmatprep.subr.mxu0 0.0
    %548 = vmatpush1.msra.mxu0 0.0
    %549 = vmatprep.subr.mxu0 0.0
    %550 = vmatpush1.msra.mxu0 0.0
    %551 = vmatprep.subr.mxu0 0.0
    %552 = vmatpush1.msra.mxu0 0.0
    %553 = vmatprep.subr.mxu0 0.0
    %554 = vmatpush1.msra.mxu0 0.0
    %555 = vmatprep.subr.mxu0 0.0
    %556 = vmatpush1.msra.mxu0 0.0
    %557 = vmatprep.subr.mxu0 0.0
    %558 = vmatpush1.msra.mxu0 0.0
    %559 = vmatprep.subr.mxu0 0.0
    %560 = vmatpush1.msra.mxu0 0.0
    %561 = vmatprep.subr.mxu0 0.0
    %562 = vmatpush1.msra.mxu0 0.0
    %563 = vmatprep.subr.mxu0 0.0
    %564 = vmatpush1.msra.mxu0 0.0
    %565 = vmatprep.subr.mxu0 0.0
    %566 = vmatpush1.msra.mxu0 0.0
    %567 = vmatprep.mubr.f32.mxu0 0.0
    %568 = vmatmul.mubr.f32.gmra.mrb[0].mxu0 %v498
    %v569 = vpop.f32.mrb[0].mxu0
    %v570 = vadd.f32 0.0, %v569
    %v571 = vpop.f32.mrb[0].mxu0
    %572 = vmatprep.mubr.f32.mxu0 0.0
    %573 = vmatmul.mubr.f32.gmra.mrb[0].mxu0 %v501
    %v574 = vpop.f32.mrb[0].mxu0
    %v575 = vadd.f32 0.0, %v574
    %v576 = vpop.f32.mrb[0].mxu0
    %577 = vdwg.mxu0
    %v578 = vld [vmem:[#allocation6] sm:$0xff]
    %v579 = vld [vmem:[#allocation6 + $0x8] sm:$0xff]
    %v580 = vld [vmem:[#allocation6 + $0x10] sm:$0xff]
    %v581 = vld [vmem:[#allocation6 + $0x18] sm:$0xff]
    %v582 = vlaneseq
    %v583 = vshrl.u32 %v582, 7
    %v584 = vsub.s32 1, %v583
    %v585 = vrot.slane %v114, %v584
    %v587 = vsel %vm291, %v570, 0
    %v590 = vsel %vm291, %v575, 0
    %592 = vmatprep.subr.mxu0 0.0
    %593 = vmatpush1.msra.mxu0 %v578
    %594 = vmatprep.subr.mxu0 0.0
    %595 = vmatpush1.msra.mxu0 %v579
    %596 = vmatprep.subr.mxu0 0.0
    %597 = vmatpush1.msra.mxu0 %v580
    %598 = vmatprep.subr.mxu0 0.0
    %599 = vmatpush1.msra.mxu0 %v581
    %600 = vmatprep.subr.mxu0 0.0
    %601 = vmatpush1.msra.mxu0 0.0
    %602 = vmatprep.subr.mxu0 0.0
    %603 = vmatpush1.msra.mxu0 0.0
    %604 = vmatprep.subr.mxu0 0.0
    %605 = vmatpush1.msra.mxu0 0.0
    %606 = vmatprep.subr.mxu0 0.0
    %607 = vmatpush1.msra.mxu0 0.0
    %608 = vmatprep.subr.mxu0 0.0
    %609 = vmatpush1.msra.mxu0 0.0
    %610 = vmatprep.subr.mxu0 0.0
    %611 = vmatpush1.msra.mxu0 0.0
    %612 = vmatprep.subr.mxu0 0.0
    %613 = vmatpush1.msra.mxu0 0.0
    %614 = vmatprep.subr.mxu0 0.0
    %615 = vmatpush1.msra.mxu0 0.0
    %616 = vmatprep.subr.mxu0 0.0
    %617 = vmatpush1.msra.mxu0 0.0
    %618 = vmatprep.subr.mxu0 0.0
    %619 = vmatpush1.msra.mxu0 0.0
    %620 = vmatprep.subr.mxu0 0.0
    %621 = vmatpush1.msra.mxu0 0.0
    %622 = vmatprep.subr.mxu0 0.0
    %623 = vmatpush1.msra.mxu0 0.0
    %624 = vmatprep.subr.mxu0 0.0
    %625 = vmatpush1.msra.mxu0 0.0
    %626 = vmatprep.subr.mxu0 0.0
    %627 = vmatpush1.msra.mxu0 0.0
    %628 = vmatprep.subr.mxu0 0.0
    %629 = vmatpush1.msra.mxu0 0.0
    %630 = vmatprep.subr.mxu0 0.0
    %631 = vmatpush1.msra.mxu0 0.0
    %632 = vmatprep.subr.mxu0 0.0
    %633 = vmatpush1.msra.mxu0 0.0
    %634 = vmatprep.subr.mxu0 0.0
    %635 = vmatpush1.msra.mxu0 0.0
    %636 = vmatprep.subr.mxu0 0.0
    %637 = vmatpush1.msra.mxu0 0.0
    %638 = vmatprep.subr.mxu0 0.0
    %639 = vmatpush1.msra.mxu0 0.0
    %640 = vmatprep.subr.mxu0 0.0
    %641 = vmatpush1.msra.mxu0 0.0
    %642 = vmatprep.subr.mxu0 0.0
    %643 = vmatpush1.msra.mxu0 0.0
    %644 = vmatprep.subr.mxu0 0.0
    %645 = vmatpush1.msra.mxu0 0.0
    %646 = vmatprep.subr.mxu0 0.0
    %647 = vmatpush1.msra.mxu0 0.0
    %648 = vmatprep.subr.mxu0 0.0
    %649 = vmatpush1.msra.mxu0 0.0
    %650 = vmatprep.subr.mxu0 0.0
    %651 = vmatpush1.msra.mxu0 0.0
    %652 = vmatprep.subr.mxu0 0.0
    %653 = vmatpush1.msra.mxu0 0.0
    %654 = vmatprep.subr.mxu0 0.0
    %655 = vmatpush1.msra.mxu0 0.0
    %656 = vmatprep.mubr.f32.mxu0 0.0
    %657 = vmatmul.mubr.f32.gmra.mrb[0].mxu0 %v587
    %v658 = vpop.f32.mrb[0].mxu0
    %v659 = vadd.f32 %v585, %v658
    %v660 = vpop.f32.mrb[0].mxu0
    %661 = vmatprep.mubr.f32.mxu0 0.0
    %662 = vmatmul.mubr.f32.gmra.mrb[0].mxu0 %v590
    %v663 = vpop.f32.mrb[0].mxu0
    %v664 = vadd.f32 %v585, %v663
    %v665 = vpop.f32.mrb[0].mxu0
    %666 = vdwg.mxu0
    %v667 = vadd.f32 %v275, %v659
    %v668 = vadd.f32 %v280, %v664
    %v669 = vsel %vm291, %v667, 0.0
    %670 = vadd.xlane.f32.xlu0 %v669
    %v671 = vpop.xlane.xlu0 %670
    %v672 = vsel %vm291, %v668, 0.0
    %673 = vadd.xlane.f32.xlu0 %v672
    %v674 = vpop.xlane.xlu0 %673
    %v675 = vrcp.pop 32.0
    %v676 = vmul.f32 %v671, %v675
    %v677 = vmul.f32 %v674, %v675
    %v678 = vmul.f32 %v667, %v667
    %v679 = vmul.f32 %v668, %v668
    %v680 = vsel %vm291, %v678, 0.0
    %681 = vadd.xlane.f32.xlu0 %v680
    %v682 = vpop.xlane.xlu0 %681
    %v683 = vsel %vm291, %v679, 0.0
    %684 = vadd.xlane.f32.xlu0 %v683
    %v685 = vpop.xlane.xlu0 %684
    %v686 = vmul.f32 %v682, %v675
    %v687 = vmul.f32 %v685, %v675
    %v688 = vmul.f32 %v676, %v676
    %v689 = vmul.f32 %v677, %v677
    %v690 = vsub.f32 %v686, %v688
    %v691 = vsub.f32 %v687, %v689
    %v692 = vsub.f32 %v667, %v676
    %v693 = vsub.f32 %v668, %v677
    %v694 = vadd.f32 %v690, 1e-12
    %v695 = vadd.f32 %v691, 1e-12
    %v696 = vrsqrt.pop %v694
    %v697 = vrsqrt.pop %v695
    %v698 = vmul.f32 %v692, %v696
    %v699 = vmul.f32 %v693, %v697
    %v700 = vlaneseq
    %v701 = vshrl.u32 %v700, 7
    %v702 = vsub.s32 2, %v701
    %v703 = vrot.slane %v114, %v702
    %v704 = vmul.f32 %v698, %v703
    %v705 = vmul.f32 %v699, %v703
    %v706 = vlaneseq
    %v707 = vshrl.u32 %v706, 7
    %v708 = vsub.s32 3, %v707
    %v709 = vrot.slane %v114, %v708
    %v710 = vadd.f32 %v704, %v709
    %v711 = vadd.f32 %v705, %v709
    %v712 = vld [vmem:[#allocation7] sm:$0xff]
    %v713 = vld [vmem:[#allocation7 + $0x8] sm:$0xff]
    %v714 = vld [vmem:[#allocation7 + $0x10] sm:$0xff]
    %v715 = vld [vmem:[#allocation7 + $0x18] sm:$0xff]
    %v716 = vlaneseq
    %v717 = vshrl.u32 %v716, 7
    %v718 = vsub.s32 4, %v717
    %v719 = vrot.slane %v114, %v718
    %v721 = vsel %vm291, %v710, 0
    %v724 = vsel %vm291, %v711, 0
    %726 = vmatprep.subr.mxu0 0.0
    %727 = vmatpush1.msra.mxu0 %v712
    %728 = vmatprep.subr.mxu0 0.0
    %729 = vmatpush1.msra.mxu0 %v713
    %730 = vmatprep.subr.mxu0 0.0
    %731 = vmatpush1.msra.mxu0 %v714
    %732 = vmatprep.subr.mxu0 0.0
    %733 = vmatpush1.msra.mxu0 %v715
    %734 = vmatprep.subr.mxu0 0.0
    %735 = vmatpush1.msra.mxu0 0.0
    %736 = vmatprep.subr.mxu0 0.0
    %737 = vmatpush1.msra.mxu0 0.0
    %738 = vmatprep.subr.mxu0 0.0
    %739 = vmatpush1.msra.mxu0 0.0
    %740 = vmatprep.subr.mxu0 0.0
    %741 = vmatpush1.msra.mxu0 0.0
    %742 = vmatprep.subr.mxu0 0.0
    %743 = vmatpush1.msra.mxu0 0.0
    %744 = vmatprep.subr.mxu0 0.0
    %745 = vmatpush1.msra.mxu0 0.0
    %746 = vmatprep.subr.mxu0 0.0
    %747 = vmatpush1.msra.mxu0 0.0
    %748 = vmatprep.subr.mxu0 0.0
    %749 = vmatpush1.msra.mxu0 0.0
    %750 = vmatprep.subr.mxu0 0.0
    %751 = vmatpush1.msra.mxu0 0.0
    %752 = vmatprep.subr.mxu0 0.0
    %753 = vmatpush1.msra.mxu0 0.0
    %754 = vmatprep.subr.mxu0 0.0
    %755 = vmatpush1.msra.mxu0 0.0
    %756 = vmatprep.subr.mxu0 0.0
    %757 = vmatpush1.msra.mxu0 0.0
    %758 = vmatprep.subr.mxu0 0.0
    %759 = vmatpush1.msra.mxu0 0.0
    %760 = vmatprep.subr.mxu0 0.0
    %761 = vmatpush1.msra.mxu0 0.0
    %762 = vmatprep.subr.mxu0 0.0
    %763 = vmatpush1.msra.mxu0 0.0
    %764 = vmatprep.subr.mxu0 0.0
    %765 = vmatpush1.msra.mxu0 0.0
    %766 = vmatprep.subr.mxu0 0.0
    %767 = vmatpush1.msra.mxu0 0.0
    %768 = vmatprep.subr.mxu0 0.0
    %769 = vmatpush1.msra.mxu0 0.0
    %770 = vmatprep.subr.mxu0 0.0
    %771 = vmatpush1.msra.mxu0 0.0
    %772 = vmatprep.subr.mxu0 0.0
    %773 = vmatpush1.msra.mxu0 0.0
    %774 = vmatprep.subr.mxu0 0.0
    %775 = vmatpush1.msra.mxu0 0.0
    %776 = vmatprep.subr.mxu0 0.0
    %777 = vmatpush1.msra.mxu0 0.0
    %778 = vmatprep.subr.mxu0 0.0
    %779 = vmatpush1.msra.mxu0 0.0
    %780 = vmatprep.subr.mxu0 0.0
    %781 = vmatpush1.msra.mxu0 0.0
    %782 = vmatprep.subr.mxu0 0.0
    %783 = vmatpush1.msra.mxu0 0.0
    %784 = vmatprep.subr.mxu0 0.0
    %785 = vmatpush1.msra.mxu0 0.0
    %786 = vmatprep.subr.mxu0 0.0
    %787 = vmatpush1.msra.mxu0 0.0
    %788 = vmatprep.subr.mxu0 0.0
    %789 = vmatpush1.msra.mxu0 0.0
    %790 = vmatprep.mubr.f32.mxu0 0.0
    %791 = vmatmul.mubr.f32.gmra.mrb[0].mxu0 %v721
    %v792 = vpop.f32.mrb[0].mxu0
    %v793 = vadd.f32 %v719, %v792
    %v794 = vpop.f32.mrb[0].mxu0
    %795 = vmatprep.mubr.f32.mxu0 0.0
    %796 = vmatmul.mubr.f32.gmra.mrb[0].mxu0 %v724
    %v797 = vpop.f32.mrb[0].mxu0
    %v798 = vadd.f32 %v719, %v797
    %v799 = vpop.f32.mrb[0].mxu0
    %800 = vdwg.mxu0
    %v801 = vmul.f32 %v793, %v793
    %v802 = vmul.f32 %v798, %v798
    %v803 = vmul.f32 %v793, %v801
    %v804 = vmul.f32 %v798, %v802
    %v805 = vmul.f32 %v803, 0.044715
    %v806 = vmul.f32 %v804, 0.044715
    %v807 = vadd.f32 %v793, %v805
    %v808 = vadd.f32 %v798, %v806
    %v809 = vmul.f32 %v807, 0.7978846
    %v810 = vmul.f32 %v808, 0.7978846
    %v811 = vtanh.pop %v809
    %v812 = vtanh.pop %v810
    %v813 = vadd.f32 %v811, 1.0
    %v814 = vadd.f32 %v812, 1.0
    %v815 = vmul.f32 %v813, 0.5
    %v816 = vmul.f32 %v814, 0.5
    %v817 = vmul.f32 %v793, %v815
    %v818 = vmul.f32 %v798, %v816
    %v819 = vld [vmem:[%s6] sm:$0xff]
    %v820 = vld [vmem:[%s6 + $0x8] sm:$0xff]
    %v821 = vld [vmem:[%s6 + $0x10] sm:$0xff]
    %v822 = vld [vmem:[%s6 + $0x18] sm:$0xff]
    %v823 = vld [vmem:[%s6 + $0x20] sm:$0xff]
    %v824 = vld [vmem:[%s6 + $0x28] sm:$0xff]
    %v825 = vld [vmem:[%s6 + $0x30] sm:$0xff]
    %v826 = vld [vmem:[%s6 + $0x38] sm:$0xff]
    %v827 = vlaneseq
    %v828 = vshrl.u32 %v827, 7
    %v829 = vsub.s32 5, %v828
    %v830 = vrot.slane %v114, %v829
    %vm831 = vcmask 523264
    %v833 = vsel %vm831, %v817, 0
    %v836 = vsel %vm831, %v818, 0
    %838 = vmatprep.subr.mxu0 0.0
    %839 = vmatpush1.msra.mxu0 %v819
    %840 = vmatprep.subr.mxu0 0.0
    %841 = vmatpush1.msra.mxu0 %v820
    %842 = vmatprep.subr.mxu0 0.0
    %843 = vmatpush1.msra.mxu0 %v821
    %844 = vmatprep.subr.mxu0 0.0
    %845 = vmatpush1.msra.mxu0 %v822
    %846 = vmatprep.subr.mxu0 0.0
    %847 = vmatpush1.msra.mxu0 %v823
    %848 = vmatprep.subr.mxu0 0.0
    %849 = vmatpush1.msra.mxu0 %v824
    %850 = vmatprep.subr.mxu0 0.0
    %851 = vmatpush1.msra.mxu0 %v825
    %852 = vmatprep.subr.mxu0 0.0
    %853 = vmatpush1.msra.mxu0 %v826
    %854 = vmatprep.subr.mxu0 0.0
    %855 = vmatpush1.msra.mxu0 0.0
    %856 = vmatprep.subr.mxu0 0.0
    %857 = vmatpush1.msra.mxu0 0.0
    %858 = vmatprep.subr.mxu0 0.0
    %859 = vmatpush1.msra.mxu0 0.0
    %860 = vmatprep.subr.mxu0 0.0
    %861 = vmatpush1.msra.mxu0 0.0
    %862 = vmatprep.subr.mxu0 0.0
    %863 = vmatpush1.msra.mxu0 0.0
    %864 = vmatprep.subr.mxu0 0.0
    %865 = vmatpush1.msra.mxu0 0.0
    %866 = vmatprep.subr.mxu0 0.0
    %867 = vmatpush1.msra.mxu0 0.0
    %868 = vmatprep.subr.mxu0 0.0
    %869 = vmatpush1.msra.mxu0 0.0
    %870 = vmatprep.subr.mxu0 0.0
    %871 = vmatpush1.msra.mxu0 0.0
    %872 = vmatprep.subr.mxu0 0.0
    %873 = vmatpush1.msra.mxu0 0.0
    %874 = vmatprep.subr.mxu0 0.0
    %875 = vmatpush1.msra.mxu0 0.0
    %876 = vmatprep.subr.mxu0 0.0
    %877 = vmatpush1.msra.mxu0 0.0
    %878 = vmatprep.subr.mxu0 0.0
    %879 = vmatpush1.msra.mxu0 0.0
    %880 = vmatprep.subr.mxu0 0.0
    %881 = vmatpush1.msra.mxu0 0.0
    %882 = vmatprep.subr.mxu0 0.0
    %883 = vmatpush1.msra.mxu0 0.0
    %884 = vmatprep.subr.mxu0 0.0
    %885 = vmatpush1.msra.mxu0 0.0
    %886 = vmatprep.subr.mxu0 0.0
    %887 = vmatpush1.msra.mxu0 0.0
    %888 = vmatprep.subr.mxu0 0.0
    %889 = vmatpush1.msra.mxu0 0.0
    %890 = vmatprep.subr.mxu0 0.0
    %891 = vmatpush1.msra.mxu0 0.0
    %892 = vmatprep.subr.mxu0 0.0
    %893 = vmatpush1.msra.mxu0 0.0
    %894 = vmatprep.subr.mxu0 0.0
    %895 = vmatpush1.msra.mxu0 0.0
    %896 = vmatprep.subr.mxu0 0.0
    %897 = vmatpush1.msra.mxu0 0.0
    %898 = vmatprep.subr.mxu0 0.0
    %899 = vmatpush1.msra.mxu0 0.0
    %900 = vmatprep.subr.mxu0 0.0
    %901 = vmatpush1.msra.mxu0 0.0
    %902 = vmatprep.mubr.f32.mxu0 0.0
    %903 = vmatmul.mubr.f32.gmra.mrb[0].mxu0 %v833
    %v904 = vpop.f32.mrb[0].mxu0
    %v905 = vadd.f32 %v830, %v904
    %v906 = vpop.f32.mrb[0].mxu0
    %907 = vmatprep.mubr.f32.mxu0 0.0
    %908 = vmatmul.mubr.f32.gmra.mrb[0].mxu0 %v836
    %v909 = vpop.f32.mrb[0].mxu0
    %v910 = vadd.f32 %v830, %v909
    %v911 = vpop.f32.mrb[0].mxu0
    %912 = vdwg.mxu0
    %v913 = vadd.f32 %v710, %v905
    %v914 = vadd.f32 %v711, %v910
    %v915 = vsel %vm291, %v913, 0.0
    %916 = vadd.xlane.f32.xlu0 %v915
    %v917 = vpop.xlane.xlu0 %916
    %v918 = vsel %vm291, %v914, 0.0
    %919 = vadd.xlane.f32.xlu0 %v918
    %v920 = vpop.xlane.xlu0 %919
    %v921 = vmul.f32 %v917, %v675
    %v922 = vmul.f32 %v920, %v675
    %v923 = vmul.f32 %v913, %v913
    %v924 = vmul.f32 %v914, %v914
    %v925 = vsel %vm291, %v923, 0.0
    %926 = vadd.xlane.f32.xlu0 %v925
    %v927 = vpop.xlane.xlu0 %926
    %v928 = vsel %vm291, %v924, 0.0
    %929 = vadd.xlane.f32.xlu0 %v928
    %v930 = vpop.xlane.xlu0 %929
    %v931 = vmul.f32 %v927, %v675
    %v932 = vmul.f32 %v930, %v675
    %v933 = vmul.f32 %v921, %v921
    %v934 = vmul.f32 %v922, %v922
    %v935 = vsub.f32 %v931, %v933
    %v936 = vsub.f32 %v932, %v934
    %v937 = vsub.f32 %v913, %v921
    %v938 = vsub.f32 %v914, %v922
    %v939 = vadd.f32 %v935, 1e-12
    %v940 = vadd.f32 %v936, 1e-12
    %v941 = vrsqrt.pop %v939
    %v942 = vrsqrt.pop %v940
    %v943 = vmul.f32 %v937, %v941
    %v944 = vmul.f32 %v938, %v942
    %v945 = vlaneseq
    %v946 = vshrl.u32 %v945, 7
    %v947 = vsub.s32 6, %v946
    %v948 = vrot.slane %v114, %v947
    %v949 = vmul.f32 %v943, %v948
    %v950 = vmul.f32 %v944, %v948
    %v951 = vlaneseq
    %v952 = vshrl.u32 %v951, 7
    %v953 = vsub.s32 7, %v952
    %v954 = vrot.slane %v114, %v953
    %v955 = vadd.f32 %v949, %v954
    %v956 = vadd.f32 %v950, %v954
    %v957 = vmul.u32 %v119, 8
    %vm958 = vcmp.eq.s32.totalorder %v148, %v957
    %v959 = vsel %vm958, 1, 0
    %v960 = vcvt.s32.f32 %v959
    %v962 = vsel %vm468, %v960, 0
    %964 = vmatprep.subr.mxu0 0.0
    %965 = vmatpush1.msra.mxu0 %v955
    %966 = vmatprep.subr.mxu0 0.0
    %967 = vmatpush1.msra.mxu0 %v956
    %968 = vmatprep.subr.mxu0 0.0
    %969 = vmatpush1.msra.mxu0 0.0
    %970 = vmatprep.subr.mxu0 0.0
    %971 = vmatpush1.msra.mxu0 0.0
    %972 = vmatprep.subr.mxu0 0.0
    %973 = vmatpush1.msra.mxu0 0.0
    %974 = vmatprep.subr.mxu0 0.0
    %975 = vmatpush1.msra.mxu0 0.0
    %976 = vmatprep.subr.mxu0 0.0
    %977 = vmatpush1.msra.mxu0 0.0
    %978 = vmatprep.subr.mxu0 0.0
    %979 = vmatpush1.msra.mxu0 0.0
    %980 = vmatprep.subr.mxu0 0.0
    %981 = vmatpush1.msra.mxu0 0.0
    %982 = vmatprep.subr.mxu0 0.0
    %983 = vmatpush1.msra.mxu0 0.0
    %984 = vmatprep.subr.mxu0 0.0
    %985 = vmatpush1.msra.mxu0 0.0
    %986 = vmatprep.subr.mxu0 0.0
    %987 = vmatpush1.msra.mxu0 0.0
    %988 = vmatprep.subr.mxu0 0.0
    %989 = vmatpush1.msra.mxu0 0.0
    %990 = vmatprep.subr.mxu0 0.0
    %991 = vmatpush1.msra.mxu0 0.0
    %992 = vmatprep.subr.mxu0 0.0
    %993 = vmatpush1.msra.mxu0 0.0
    %994 = vmatprep.subr.mxu0 0.0
    %995 = vmatpush1.msra.mxu0 0.0
    %996 = vmatprep.subr.mxu0 0.0
    %997 = vmatpush1.msra.mxu0 0.0
    %998 = vmatprep.subr.mxu0 0.0
    %999 = vmatpush1.msra.mxu0 0.0
    %1000 = vmatprep.subr.mxu0 0.0
    %1001 = vmatpush1.msra.mxu0 0.0
    %1002 = vmatprep.subr.mxu0 0.0
    %1003 = vmatpush1.msra.mxu0 0.0
    %1004 = vmatprep.subr.mxu0 0.0
    %1005 = vmatpush1.msra.mxu0 0.0
    %1006 = vmatprep.subr.mxu0 0.0
    %1007 = vmatpush1.msra.mxu0 0.0
    %1008 = vmatprep.subr.mxu0 0.0
    %1009 = vmatpush1.msra.mxu0 0.0
    %1010 = vmatprep.subr.mxu0 0.0
    %1011 = vmatpush1.msra.mxu0 0.0
    %1012 = vmatprep.subr.mxu0 0.0
    %1013 = vmatpush1.msra.mxu0 0.0
    %1014 = vmatprep.subr.mxu0 0.0
    %1015 = vmatpush1.msra.mxu0 0.0
    %1016 = vmatprep.subr.mxu0 0.0
    %1017 = vmatpush1.msra.mxu0 0.0
    %1018 = vmatprep.subr.mxu0 0.0
    %1019 = vmatpush1.msra.mxu0 0.0
    %1020 = vmatprep.subr.mxu0 0.0
    %1021 = vmatpush1.msra.mxu0 0.0
    %1022 = vmatprep.subr.mxu0 0.0
    %1023 = vmatpush1.msra.mxu0 0.0
    %1024 = vmatprep.subr.mxu0 0.0
    %1025 = vmatpush1.msra.mxu0 0.0
    %1026 = vmatprep.subr.mxu0 0.0
    %1027 = vmatpush1.msra.mxu0 0.0
    %1028 = vmatprep.mubr.f32.mxu0 0.0
    %1029 = vmatmul.mubr.f32.gmra.mrb[0].mxu0 %v962
    %v1030 = vpop.f32.mrb[0].mxu0
    %v1031 = vadd.f32 0.0, %v1030
    %v1032 = vpop.f32.mrb[0].mxu0
    %1033 = vdwg.mxu0
    %v1034 = vld [vmem:[#allocation9] sm:$0xff]
    %v1035 = vld [vmem:[#allocation9 + $0x8] sm:$0xff]
    %v1036 = vld [vmem:[#allocation9 + $0x10] sm:$0xff]
    %v1037 = vld [vmem:[#allocation9 + $0x18] sm:$0xff]
    %v1038 = vlaneseq
    %v1039 = vshrl.u32 %v1038, 7
    %v1040 = vsub.s32 0, %v1039
    %v1041 = vrot.slane %v115, %v1040
    %v1043 = vsel %vm291, %v1031, 0
    %1045 = vmatprep.subr.mxu0 0.0
    %1046 = vmatpush1.msra.mxu0 %v1034
    %1047 = vmatprep.subr.mxu0 0.0
    %1048 = vmatpush1.msra.mxu0 %v1035
    %1049 = vmatprep.subr.mxu0 0.0
    %1050 = vmatpush1.msra.mxu0 %v1036
    %1051 = vmatprep.subr.mxu0 0.0
    %1052 = vmatpush1.msra.mxu0 %v1037
    %1053 = vmatprep.subr.mxu0 0.0
    %1054 = vmatpush1.msra.mxu0 0.0
    %1055 = vmatprep.subr.mxu0 0.0
    %1056 = vmatpush1.msra.mxu0 0.0
    %1057 = vmatprep.subr.mxu0 0.0
    %1058 = vmatpush1.msra.mxu0 0.0
    %1059 = vmatprep.subr.mxu0 0.0
    %1060 = vmatpush1.msra.mxu0 0.0
    %1061 = vmatprep.subr.mxu0 0.0
    %1062 = vmatpush1.msra.mxu0 0.0
    %1063 = vmatprep.subr.mxu0 0.0
    %1064 = vmatpush1.msra.mxu0 0.0
    %1065 = vmatprep.subr.mxu0 0.0
    %1066 = vmatpush1.msra.mxu0 0.0
    %1067 = vmatprep.subr.mxu0 0.0
    %1068 = vmatpush1.msra.mxu0 0.0
    %1069 = vmatprep.subr.mxu0 0.0
    %1070 = vmatpush1.msra.mxu0 0.0
    %1071 = vmatprep.subr.mxu0 0.0
    %1072 = vmatpush1.msra.mxu0 0.0
    %1073 = vmatprep.subr.mxu0 0.0
    %1074 = vmatpush1.msra.mxu0 0.0
    %1075 = vmatprep.subr.mxu0 0.0
    %1076 = vmatpush1.msra.mxu0 0.0
    %1077 = vmatprep.subr.mxu0 0.0
    %1078 = vmatpush1.msra.mxu0 0.0
    %1079 = vmatprep.subr.mxu0 0.0
    %1080 = vmatpush1.msra.mxu0 0.0
    %1081 = vmatprep.subr.mxu0 0.0
    %1082 = vmatpush1.msra.mxu0 0.0
    %1083 = vmatprep.subr.mxu0 0.0
    %1084 = vmatpush1.msra.mxu0 0.0
    %1085 = vmatprep.subr.mxu0 0.0
    %1086 = vmatpush1.msra.mxu0 0.0
    %1087 = vmatprep.subr.mxu0 0.0
    %1088 = vmatpush1.msra.mxu0 0.0
    %1089 = vmatprep.subr.mxu0 0.0
    %1090 = vmatpush1.msra.mxu0 0.0
    %1091 = vmatprep.subr.mxu0 0.0
    %1092 = vmatpush1.msra.mxu0 0.0
    %1093 = vmatprep.subr.mxu0 0.0
    %1094 = vmatpush1.msra.mxu0 0.0
    %1095 = vmatprep.subr.mxu0 0.0
    %1096 = vmatpush1.msra.mxu0 0.0
    %1097 = vmatprep.subr.mxu0 0.0
    %1098 = vmatpush1.msra.mxu0 0.0
    %1099 = vmatprep.subr.mxu0 0.0
    %1100 = vmatpush1.msra.mxu0 0.0
    %1101 = vmatprep.subr.mxu0 0.0
    %1102 = vmatpush1.msra.mxu0 0.0
    %1103 = vmatprep.subr.mxu0 0.0
    %1104 = vmatpush1.msra.mxu0 0.0
    %1105 = vmatprep.subr.mxu0 0.0
    %1106 = vmatpush1.msra.mxu0 0.0
    %1107 = vmatprep.subr.mxu0 0.0
    %1108 = vmatpush1.msra.mxu0 0.0
    %1109 = vmatprep.mubr.f32.mxu0 0.0
    %1110 = vmatmul.mubr.f32.gmra.mrb[0].mxu0 %v1043
    %v1111 = vpop.f32.mrb[0].mxu0
    %v1112 = vadd.f32 %v1041, %v1111
    %v1113 = vpop.f32.mrb[0].mxu0
    %1114 = vdwg.mxu0
    %1115 = vst [vmem:[%s9] sm:$0x3] %v1112
    // Predicated region
    $region62: #{_lambda_.1} parent=1 // pred_check
      _
    $region63: #{_lambda_.1} parent=1 // pred_check_branch
      %1117 = sbr.rel (0) target = $region65
    $region64: #{_lambda_.1} parent=1 // pred_region
      _
    $region65: #{_lambda_.1} parent=1 // pred_fallthru
      _
    // Predicated region
    $region66: #{_lambda_.1} parent=1 // pred_check
      _
    $region67: #{_lambda_.1} parent=1 // pred_check_branch
      %1119 = sbr.rel (0) target = $region69
    $region68: #{_lambda_.1} parent=1 // pred_region
      _
    $region69: #{_lambda_.1} parent=1 // pred_fallthru
      _
    %1120 = vsyncpa [#allocation3], 1
    %1121 = vsyncpa [#allocation5], 1
    %1122 = vsyncpa [#allocation8], 1
    %1123 = vsyncpa [#allocation11], 1

</llo_original>
